<compile_context>
chip_gen: v7x
topology: tpu7x:2x2x1
jax: 0.10.0
libtpu: 0.0.40
codegen_flags: <defaults>
</compile_context>

<pallas_src>
import functools

import jax
import jax.numpy as jnp
from jax.experimental import pallas as pl
from jax.experimental.pallas import tpu as pltpu


def _res_block_kernel(x_ref, xres_ref, w1_ref, b1_ref, w2_ref, b2_ref, mask_ref,
                      out_ref, hpad_ref, *, Wp, M, Lc, N):
    """Fused residual block, everything resident in VMEM.

    x_ref    : (C_in, C_out*N, Lm)  f32  zero-padded x planes with an M-lane
                                         margin, replicated across C_out rows
    xres_ref : (C_out*N, Lc)        f32  x in the packed output layout (residual)
    w*_ref   : (C_in*9, C_out*N, Lc) f32 per-(ci, tap) weights, pre-broadcast
    b*_ref   : (C_out*N, Lc)        f32  biases, pre-broadcast
    mask_ref : (C_out*N, Lc)        f32  1.0 on interior padded positions, else 0
    out_ref  : (C_out*N, Lc)        f32  output in padded coordinates
    hpad_ref : (C_mid, C_out*N, Lm) f32  scratch: conv2's input slab
    """
    rows = x_ref.shape[1]            # C_out * N
    C_out = rows // N
    # 9 static tap offsets in flat padded coordinates.
    tap_offs = [(kh - 1) * Wp + (kw - 1) for kh in range(3) for kw in range(3)]

    def conv3x3(slab_ref, w_ref, b_ref):
        n_in = slab_ref.shape[0]
        acc = b_ref[...]                                     # (C_out*N, Lc)
        j = 0
        for ci in range(n_in):
            for d in tap_offs:
                # one full-width FMA covering all (co, n) rows per (ci, tap)
                acc = acc + w_ref[j] * slab_ref[ci, :, M + d:M + d + Lc]
                j += 1
        return acc

    # ---- conv1 + ReLU; border MUST be zeroed so conv2 sees zero padding -----
    h = jnp.maximum(conv3x3(x_ref, w1_ref, b1_ref), 0.0) * mask_ref[...]

    # ---- build conv2's input slab: each h-channel replicated across C_out
    #      rows, stored at the lane-aligned interior offset M (full-width).
    hpad_ref[...] = jnp.zeros(hpad_ref.shape, hpad_ref.dtype)
    C_mid = hpad_ref.shape[0]
    for ci in range(C_mid):
        h_ci = h[ci * N:(ci + 1) * N, :]                     # (N, Lc)
        hpad_ref[ci, :, M:M + Lc] = jnp.concatenate([h_ci] * C_out, axis=0)

    # ---- conv2 + ReLU + residual, lane-dense full-width store ---------------
    acc2 = conv3x3(hpad_ref, w2_ref, b2_ref)
    out_ref[...] = jnp.maximum(acc2, 0.0) + xres_ref[...]


def simple_residual_block(x, params):
    """Pallas implementation of SimpleResidualBlock.forward (NCHW input)."""
    w1, b1, w2, b2 = params
    N, C, H, W = x.shape
    C_out = w1.shape[0]
    Hp, Wp = H + 2, W + 2
    L = Hp * Wp                          # 324 padded-plane length
    Lc = int(pl.cdiv(L, 128)) * 128      # 384: lane-tile-rounded compute width
    M = 128                              # lane-aligned margin for tap slices
    Lm = M + Lc + M                      # 640 (covers all 9 tap offsets)
    R = C_out * N                        # packed sublane rows

    # ---- layout plumbing in the wrapper (pure copies, fused by XLA) ---------
    xpad = jnp.pad(x, ((0, 0), (0, 0), (1, 1), (1, 1)))           # (N,C,Hp,Wp)
    xflat = jnp.transpose(xpad.reshape(N, C, L), (1, 0, 2))       # (C,N,L)

    # conv1 input slab: padded planes replicated across C_out, with M-lane
    # margin so every 3x3 tap is a static, in-bounds lane slice in the kernel.
    xslab = jnp.broadcast_to(xflat[:, None], (C, C_out, N, L)).reshape(C, R, L)
    xslab = jnp.pad(xslab, ((0, 0), (0, 0), (M, Lm - M - L)))     # (C,R,Lm)

    # residual term in the packed output layout (padded coords).
    xres = jnp.pad(xflat.reshape(R, L), ((0, 0), (0, Lc - L)))    # (R,Lc)

    def weight_tile(w):                  # OIHW -> (C_in*9, R, Lc)
        o, i = w.shape[0], w.shape[1]
        wt = jnp.transpose(w, (1, 2, 3, 0)).reshape(i * 9, o)     # j = ci*9+kh*3+kw
        wt = jnp.repeat(wt, N, axis=1)                            # col = co*N + n
        return jnp.broadcast_to(wt[:, :, None], (i * 9, o * N, Lc))

    def bias_tile(b):
        return jnp.broadcast_to(jnp.repeat(b, N)[:, None], (R, Lc))

    # interior mask: 1.0 where the flat padded position is a real pixel
    # (not border, not the rounded-up garbage lanes).
    pos = jnp.arange(Lc, dtype=jnp.int32)
    row, col = pos // Wp, pos % Wp
    interior = (pos < L) & (row >= 1) & (row <= H) & (col >= 1) & (col <= W)
    mask = jnp.broadcast_to(interior.astype(jnp.float32)[None, :], (R, Lc))

    kernel = functools.partial(_res_block_kernel, Wp=Wp, M=M, Lc=Lc, N=N)
    vmem = pl.BlockSpec(memory_space=pltpu.MemorySpace.VMEM)

    # NOTE: at (2,3,16,16) a single gridless invocation with everything resident
    # in VMEM (<1 MiB) is optimal on v5e/v6e/v7x. When N/H/C grow, add a grid
    # over N (or H tiles) with dimension_semantics=("parallel", ...) so v7x's
    # two TensorCores are used, and size blocks against its 64 MiB VMEM; at
    # C >= 64 switch the tap loop to the 9-shifted-matmul MXU form.
    out_flat = pl.pallas_call(
        kernel,
        out_shape=jax.ShapeDtypeStruct((R, Lc), jnp.float32),
        in_specs=[vmem] * 7,
        out_specs=vmem,
        scratch_shapes=[pltpu.VMEM((C_out, R, Lm), jnp.float32)],  # conv2 slab
    )(xslab, xres, weight_tile(w1), bias_tile(b1),
      weight_tile(w2), bias_tile(b2), mask)

    # crop padded coords -> (N, C_out, H, W); layout-only, fused by XLA.
    out = out_flat[:, :L].reshape(C_out, N, Hp, Wp)[:, :, 1:1 + H, 1:1 + W]
    return jnp.transpose(out, (1, 0, 2, 3))


# ---------------------------------------------------------------------------
# Pure-JAX reference (for correctness check)
# ---------------------------------------------------------------------------
def _conv_ref(x, w, b):
    y = jax.lax.conv_general_dilated(
        x, w, window_strides=(1, 1), padding=((1, 1), (1, 1)),
        dimension_numbers=("NCHW", "OIHW", "NCHW"))
    return y + b[None, :, None, None]


def reference_forward(x, params):
    w1, b1, w2, b2 = params
    h = jax.nn.relu(_conv_ref(x, w1, b1))
    return jax.nn.relu(_conv_ref(h, w2, b2)) + x


if __name__ == "__main__":
    key = jax.random.PRNGKey(0)
    k1, k2, k3, k4, kx = jax.random.split(key, 5)

    # Deterministic init, shapes match nn.Conv2d(3, 3, 3, padding=1): weight OIHW.
    fan_in = 3 * 3 * 3
    bound = 1.0 / (fan_in ** 0.5)
    w1 = jax.random.uniform(k1, (3, 3, 3, 3), jnp.float32, -bound, bound)
    b1 = jax.random.uniform(k2, (3,), jnp.float32, -bound, bound)
    w2 = jax.random.uniform(k3, (3, 3, 3, 3), jnp.float32, -bound, bound)
    b2 = jax.random.uniform(k4, (3,), jnp.float32, -bound, bound)
    params = (w1, b1, w2, b2)

    # NCHW input, like the PyTorch module.
    x = jax.random.normal(kx, (2, 3, 16, 16), jnp.float32)

    out = jax.jit(simple_residual_block)(x, params)
    out = jax.block_until_ready(out)

    ref = jax.block_until_ready(reference_forward(x, params))
    assert out.shape == ref.shape and out.dtype == ref.dtype
    assert jnp.allclose(out, ref, rtol=1e-5, atol=1e-5), "mismatch vs. reference conv"

    print("KERNEL_OK")
</pallas_src>

<mosaic_0001>
module attributes {stable_mosaic.version = 11 : i64} {
  func.func @_res_block_kernel(%arg0: memref<3x6x640xf32, #tpu.memory_space<vmem>>, %arg1: memref<6x384xf32, #tpu.memory_space<vmem>>, %arg2: memref<27x6x384xf32, #tpu.memory_space<vmem>>, %arg3: memref<6x384xf32, #tpu.memory_space<vmem>>, %arg4: memref<27x6x384xf32, #tpu.memory_space<vmem>>, %arg5: memref<6x384xf32, #tpu.memory_space<vmem>>, %arg6: memref<6x384xf32, #tpu.memory_space<vmem>>, %arg7: memref<6x384xf32, #tpu.memory_space<vmem>>, %arg8: memref<3x6x640xf32, #tpu.memory_space<vmem>>) attributes {dimension_semantics = [], scalar_prefetch = 0 : i64, scratch_operands = 1 : i64, tpu.core_type = #tpu.core_type<tc>} {
    %c0 = arith.constant 0 : index
    %c0_0 = arith.constant 0 : index
    %0 = vector.load %arg3[%c0, %c0_0] : memref<6x384xf32, #tpu.memory_space<vmem>>, vector<6x384xf32>
    %c0_1 = arith.constant 0 : index
    %c0_2 = arith.constant 0 : index
    %c0_3 = arith.constant 0 : index
    %1 = vector.load %arg2[%c0_1, %c0_2, %c0_3] : memref<27x6x384xf32, #tpu.memory_space<vmem>>, vector<1x6x384xf32>
    %2 = vector.shape_cast %1 : vector<1x6x384xf32> to vector<6x384xf32>
    %c0_4 = arith.constant 0 : index
    %c0_5 = arith.constant 0 : index
    %c109 = arith.constant 109 : index
    %3 = vector.load %arg0[%c0_4, %c0_5, %c109] : memref<3x6x640xf32, #tpu.memory_space<vmem>>, vector<1x6x384xf32>
    %4 = vector.shape_cast %3 : vector<1x6x384xf32> to vector<6x384xf32>
    %5 = arith.mulf %2, %4 : vector<6x384xf32>
    %6 = arith.addf %0, %5 : vector<6x384xf32>
    %c1 = arith.constant 1 : index
    %c0_6 = arith.constant 0 : index
    %c0_7 = arith.constant 0 : index
    %7 = vector.load %arg2[%c1, %c0_6, %c0_7] : memref<27x6x384xf32, #tpu.memory_space<vmem>>, vector<1x6x384xf32>
    %8 = vector.shape_cast %7 : vector<1x6x384xf32> to vector<6x384xf32>
    %c0_8 = arith.constant 0 : index
    %c0_9 = arith.constant 0 : index
    %c110 = arith.constant 110 : index
    %9 = vector.load %arg0[%c0_8, %c0_9, %c110] : memref<3x6x640xf32, #tpu.memory_space<vmem>>, vector<1x6x384xf32>
    %10 = vector.shape_cast %9 : vector<1x6x384xf32> to vector<6x384xf32>
    %11 = arith.mulf %8, %10 : vector<6x384xf32>
    %12 = arith.addf %6, %11 : vector<6x384xf32>
    %c2 = arith.constant 2 : index
    %c0_10 = arith.constant 0 : index
    %c0_11 = arith.constant 0 : index
    %13 = vector.load %arg2[%c2, %c0_10, %c0_11] : memref<27x6x384xf32, #tpu.memory_space<vmem>>, vector<1x6x384xf32>
    %14 = vector.shape_cast %13 : vector<1x6x384xf32> to vector<6x384xf32>
    %c0_12 = arith.constant 0 : index
    %c0_13 = arith.constant 0 : index
    %c111 = arith.constant 111 : index
    %15 = vector.load %arg0[%c0_12, %c0_13, %c111] : memref<3x6x640xf32, #tpu.memory_space<vmem>>, vector<1x6x384xf32>
    %16 = vector.shape_cast %15 : vector<1x6x384xf32> to vector<6x384xf32>
    %17 = arith.mulf %14, %16 : vector<6x384xf32>
    %18 = arith.addf %12, %17 : vector<6x384xf32>
    %c3 = arith.constant 3 : index
    %c0_14 = arith.constant 0 : index
    %c0_15 = arith.constant 0 : index
    %19 = vector.load %arg2[%c3, %c0_14, %c0_15] : memref<27x6x384xf32, #tpu.memory_space<vmem>>, vector<1x6x384xf32>
    %20 = vector.shape_cast %19 : vector<1x6x384xf32> to vector<6x384xf32>
    %c0_16 = arith.constant 0 : index
    %c0_17 = arith.constant 0 : index
    %c127 = arith.constant 127 : index
    %21 = vector.load %arg0[%c0_16, %c0_17, %c127] : memref<3x6x640xf32, #tpu.memory_space<vmem>>, vector<1x6x384xf32>
    %22 = vector.shape_cast %21 : vector<1x6x384xf32> to vector<6x384xf32>
    %23 = arith.mulf %20, %22 : vector<6x384xf32>
    %24 = arith.addf %18, %23 : vector<6x384xf32>
    %c4 = arith.constant 4 : index
    %c0_18 = arith.constant 0 : index
    %c0_19 = arith.constant 0 : index
    %25 = vector.load %arg2[%c4, %c0_18, %c0_19] : memref<27x6x384xf32, #tpu.memory_space<vmem>>, vector<1x6x384xf32>
    %26 = vector.shape_cast %25 : vector<1x6x384xf32> to vector<6x384xf32>
    %c0_20 = arith.constant 0 : index
    %c0_21 = arith.constant 0 : index
    %c128 = arith.constant 128 : index
    %27 = vector.load %arg0[%c0_20, %c0_21, %c128] : memref<3x6x640xf32, #tpu.memory_space<vmem>>, vector<1x6x384xf32>
    %28 = vector.shape_cast %27 : vector<1x6x384xf32> to vector<6x384xf32>
    %29 = arith.mulf %26, %28 : vector<6x384xf32>
    %30 = arith.addf %24, %29 : vector<6x384xf32>
    %c5 = arith.constant 5 : index
    %c0_22 = arith.constant 0 : index
    %c0_23 = arith.constant 0 : index
    %31 = vector.load %arg2[%c5, %c0_22, %c0_23] : memref<27x6x384xf32, #tpu.memory_space<vmem>>, vector<1x6x384xf32>
    %32 = vector.shape_cast %31 : vector<1x6x384xf32> to vector<6x384xf32>
    %c0_24 = arith.constant 0 : index
    %c0_25 = arith.constant 0 : index
    %c129 = arith.constant 129 : index
    %33 = vector.load %arg0[%c0_24, %c0_25, %c129] : memref<3x6x640xf32, #tpu.memory_space<vmem>>, vector<1x6x384xf32>
    %34 = vector.shape_cast %33 : vector<1x6x384xf32> to vector<6x384xf32>
    %35 = arith.mulf %32, %34 : vector<6x384xf32>
    %36 = arith.addf %30, %35 : vector<6x384xf32>
    %c6 = arith.constant 6 : index
    %c0_26 = arith.constant 0 : index
    %c0_27 = arith.constant 0 : index
    %37 = vector.load %arg2[%c6, %c0_26, %c0_27] : memref<27x6x384xf32, #tpu.memory_space<vmem>>, vector<1x6x384xf32>
    %38 = vector.shape_cast %37 : vector<1x6x384xf32> to vector<6x384xf32>
    %c0_28 = arith.constant 0 : index
    %c0_29 = arith.constant 0 : index
    %c145 = arith.constant 145 : index
    %39 = vector.load %arg0[%c0_28, %c0_29, %c145] : memref<3x6x640xf32, #tpu.memory_space<vmem>>, vector<1x6x384xf32>
    %40 = vector.shape_cast %39 : vector<1x6x384xf32> to vector<6x384xf32>
    %41 = arith.mulf %38, %40 : vector<6x384xf32>
    %42 = arith.addf %36, %41 : vector<6x384xf32>
    %c7 = arith.constant 7 : index
    %c0_30 = arith.constant 0 : index
    %c0_31 = arith.constant 0 : index
    %43 = vector.load %arg2[%c7, %c0_30, %c0_31] : memref<27x6x384xf32, #tpu.memory_space<vmem>>, vector<1x6x384xf32>
    %44 = vector.shape_cast %43 : vector<1x6x384xf32> to vector<6x384xf32>
    %c0_32 = arith.constant 0 : index
    %c0_33 = arith.constant 0 : index
    %c146 = arith.constant 146 : index
    %45 = vector.load %arg0[%c0_32, %c0_33, %c146] : memref<3x6x640xf32, #tpu.memory_space<vmem>>, vector<1x6x384xf32>
    %46 = vector.shape_cast %45 : vector<1x6x384xf32> to vector<6x384xf32>
    %47 = arith.mulf %44, %46 : vector<6x384xf32>
    %48 = arith.addf %42, %47 : vector<6x384xf32>
    %c8 = arith.constant 8 : index
    %c0_34 = arith.constant 0 : index
    %c0_35 = arith.constant 0 : index
    %49 = vector.load %arg2[%c8, %c0_34, %c0_35] : memref<27x6x384xf32, #tpu.memory_space<vmem>>, vector<1x6x384xf32>
    %50 = vector.shape_cast %49 : vector<1x6x384xf32> to vector<6x384xf32>
    %c0_36 = arith.constant 0 : index
    %c0_37 = arith.constant 0 : index
    %c147 = arith.constant 147 : index
    %51 = vector.load %arg0[%c0_36, %c0_37, %c147] : memref<3x6x640xf32, #tpu.memory_space<vmem>>, vector<1x6x384xf32>
    %52 = vector.shape_cast %51 : vector<1x6x384xf32> to vector<6x384xf32>
    %53 = arith.mulf %50, %52 : vector<6x384xf32>
    %54 = arith.addf %48, %53 : vector<6x384xf32>
    %c9 = arith.constant 9 : index
    %c0_38 = arith.constant 0 : index
    %c0_39 = arith.constant 0 : index
    %55 = vector.load %arg2[%c9, %c0_38, %c0_39] : memref<27x6x384xf32, #tpu.memory_space<vmem>>, vector<1x6x384xf32>
    %56 = vector.shape_cast %55 : vector<1x6x384xf32> to vector<6x384xf32>
    %c1_40 = arith.constant 1 : index
    %c0_41 = arith.constant 0 : index
    %c109_42 = arith.constant 109 : index
    %57 = vector.load %arg0[%c1_40, %c0_41, %c109_42] : memref<3x6x640xf32, #tpu.memory_space<vmem>>, vector<1x6x384xf32>
    %58 = vector.shape_cast %57 : vector<1x6x384xf32> to vector<6x384xf32>
    %59 = arith.mulf %56, %58 : vector<6x384xf32>
    %60 = arith.addf %54, %59 : vector<6x384xf32>
    %c10 = arith.constant 10 : index
    %c0_43 = arith.constant 0 : index
    %c0_44 = arith.constant 0 : index
    %61 = vector.load %arg2[%c10, %c0_43, %c0_44] : memref<27x6x384xf32, #tpu.memory_space<vmem>>, vector<1x6x384xf32>
    %62 = vector.shape_cast %61 : vector<1x6x384xf32> to vector<6x384xf32>
    %c1_45 = arith.constant 1 : index
    %c0_46 = arith.constant 0 : index
    %c110_47 = arith.constant 110 : index
    %63 = vector.load %arg0[%c1_45, %c0_46, %c110_47] : memref<3x6x640xf32, #tpu.memory_space<vmem>>, vector<1x6x384xf32>
    %64 = vector.shape_cast %63 : vector<1x6x384xf32> to vector<6x384xf32>
    %65 = arith.mulf %62, %64 : vector<6x384xf32>
    %66 = arith.addf %60, %65 : vector<6x384xf32>
    %c11 = arith.constant 11 : index
    %c0_48 = arith.constant 0 : index
    %c0_49 = arith.constant 0 : index
    %67 = vector.load %arg2[%c11, %c0_48, %c0_49] : memref<27x6x384xf32, #tpu.memory_space<vmem>>, vector<1x6x384xf32>
    %68 = vector.shape_cast %67 : vector<1x6x384xf32> to vector<6x384xf32>
    %c1_50 = arith.constant 1 : index
    %c0_51 = arith.constant 0 : index
    %c111_52 = arith.constant 111 : index
    %69 = vector.load %arg0[%c1_50, %c0_51, %c111_52] : memref<3x6x640xf32, #tpu.memory_space<vmem>>, vector<1x6x384xf32>
    %70 = vector.shape_cast %69 : vector<1x6x384xf32> to vector<6x384xf32>
    %71 = arith.mulf %68, %70 : vector<6x384xf32>
    %72 = arith.addf %66, %71 : vector<6x384xf32>
    %c12 = arith.constant 12 : index
    %c0_53 = arith.constant 0 : index
    %c0_54 = arith.constant 0 : index
    %73 = vector.load %arg2[%c12, %c0_53, %c0_54] : memref<27x6x384xf32, #tpu.memory_space<vmem>>, vector<1x6x384xf32>
    %74 = vector.shape_cast %73 : vector<1x6x384xf32> to vector<6x384xf32>
    %c1_55 = arith.constant 1 : index
    %c0_56 = arith.constant 0 : index
    %c127_57 = arith.constant 127 : index
    %75 = vector.load %arg0[%c1_55, %c0_56, %c127_57] : memref<3x6x640xf32, #tpu.memory_space<vmem>>, vector<1x6x384xf32>
    %76 = vector.shape_cast %75 : vector<1x6x384xf32> to vector<6x384xf32>
    %77 = arith.mulf %74, %76 : vector<6x384xf32>
    %78 = arith.addf %72, %77 : vector<6x384xf32>
    %c13 = arith.constant 13 : index
    %c0_58 = arith.constant 0 : index
    %c0_59 = arith.constant 0 : index
    %79 = vector.load %arg2[%c13, %c0_58, %c0_59] : memref<27x6x384xf32, #tpu.memory_space<vmem>>, vector<1x6x384xf32>
    %80 = vector.shape_cast %79 : vector<1x6x384xf32> to vector<6x384xf32>
    %c1_60 = arith.constant 1 : index
    %c0_61 = arith.constant 0 : index
    %c128_62 = arith.constant 128 : index
    %81 = vector.load %arg0[%c1_60, %c0_61, %c128_62] : memref<3x6x640xf32, #tpu.memory_space<vmem>>, vector<1x6x384xf32>
    %82 = vector.shape_cast %81 : vector<1x6x384xf32> to vector<6x384xf32>
    %83 = arith.mulf %80, %82 : vector<6x384xf32>
    %84 = arith.addf %78, %83 : vector<6x384xf32>
    %c14 = arith.constant 14 : index
    %c0_63 = arith.constant 0 : index
    %c0_64 = arith.constant 0 : index
    %85 = vector.load %arg2[%c14, %c0_63, %c0_64] : memref<27x6x384xf32, #tpu.memory_space<vmem>>, vector<1x6x384xf32>
    %86 = vector.shape_cast %85 : vector<1x6x384xf32> to vector<6x384xf32>
    %c1_65 = arith.constant 1 : index
    %c0_66 = arith.constant 0 : index
    %c129_67 = arith.constant 129 : index
    %87 = vector.load %arg0[%c1_65, %c0_66, %c129_67] : memref<3x6x640xf32, #tpu.memory_space<vmem>>, vector<1x6x384xf32>
    %88 = vector.shape_cast %87 : vector<1x6x384xf32> to vector<6x384xf32>
    %89 = arith.mulf %86, %88 : vector<6x384xf32>
    %90 = arith.addf %84, %89 : vector<6x384xf32>
    %c15 = arith.constant 15 : index
    %c0_68 = arith.constant 0 : index
    %c0_69 = arith.constant 0 : index
    %91 = vector.load %arg2[%c15, %c0_68, %c0_69] : memref<27x6x384xf32, #tpu.memory_space<vmem>>, vector<1x6x384xf32>
    %92 = vector.shape_cast %91 : vector<1x6x384xf32> to vector<6x384xf32>
    %c1_70 = arith.constant 1 : index
    %c0_71 = arith.constant 0 : index
    %c145_72 = arith.constant 145 : index
    %93 = vector.load %arg0[%c1_70, %c0_71, %c145_72] : memref<3x6x640xf32, #tpu.memory_space<vmem>>, vector<1x6x384xf32>
    %94 = vector.shape_cast %93 : vector<1x6x384xf32> to vector<6x384xf32>
    %95 = arith.mulf %92, %94 : vector<6x384xf32>
    %96 = arith.addf %90, %95 : vector<6x384xf32>
    %c16 = arith.constant 16 : index
    %c0_73 = arith.constant 0 : index
    %c0_74 = arith.constant 0 : index
    %97 = vector.load %arg2[%c16, %c0_73, %c0_74] : memref<27x6x384xf32, #tpu.memory_space<vmem>>, vector<1x6x384xf32>
    %98 = vector.shape_cast %97 : vector<1x6x384xf32> to vector<6x384xf32>
    %c1_75 = arith.constant 1 : index
    %c0_76 = arith.constant 0 : index
    %c146_77 = arith.constant 146 : index
    %99 = vector.load %arg0[%c1_75, %c0_76, %c146_77] : memref<3x6x640xf32, #tpu.memory_space<vmem>>, vector<1x6x384xf32>
    %100 = vector.shape_cast %99 : vector<1x6x384xf32> to vector<6x384xf32>
    %101 = arith.mulf %98, %100 : vector<6x384xf32>
    %102 = arith.addf %96, %101 : vector<6x384xf32>
    %c17 = arith.constant 17 : index
    %c0_78 = arith.constant 0 : index
    %c0_79 = arith.constant 0 : index
    %103 = vector.load %arg2[%c17, %c0_78, %c0_79] : memref<27x6x384xf32, #tpu.memory_space<vmem>>, vector<1x6x384xf32>
    %104 = vector.shape_cast %103 : vector<1x6x384xf32> to vector<6x384xf32>
    %c1_80 = arith.constant 1 : index
    %c0_81 = arith.constant 0 : index
    %c147_82 = arith.constant 147 : index
    %105 = vector.load %arg0[%c1_80, %c0_81, %c147_82] : memref<3x6x640xf32, #tpu.memory_space<vmem>>, vector<1x6x384xf32>
    %106 = vector.shape_cast %105 : vector<1x6x384xf32> to vector<6x384xf32>
    %107 = arith.mulf %104, %106 : vector<6x384xf32>
    %108 = arith.addf %102, %107 : vector<6x384xf32>
    %c18 = arith.constant 18 : index
    %c0_83 = arith.constant 0 : index
    %c0_84 = arith.constant 0 : index
    %109 = vector.load %arg2[%c18, %c0_83, %c0_84] : memref<27x6x384xf32, #tpu.memory_space<vmem>>, vector<1x6x384xf32>
    %110 = vector.shape_cast %109 : vector<1x6x384xf32> to vector<6x384xf32>
    %c2_85 = arith.constant 2 : index
    %c0_86 = arith.constant 0 : index
    %c109_87 = arith.constant 109 : index
    %111 = vector.load %arg0[%c2_85, %c0_86, %c109_87] : memref<3x6x640xf32, #tpu.memory_space<vmem>>, vector<1x6x384xf32>
    %112 = vector.shape_cast %111 : vector<1x6x384xf32> to vector<6x384xf32>
    %113 = arith.mulf %110, %112 : vector<6x384xf32>
    %114 = arith.addf %108, %113 : vector<6x384xf32>
    %c19 = arith.constant 19 : index
    %c0_88 = arith.constant 0 : index
    %c0_89 = arith.constant 0 : index
    %115 = vector.load %arg2[%c19, %c0_88, %c0_89] : memref<27x6x384xf32, #tpu.memory_space<vmem>>, vector<1x6x384xf32>
    %116 = vector.shape_cast %115 : vector<1x6x384xf32> to vector<6x384xf32>
    %c2_90 = arith.constant 2 : index
    %c0_91 = arith.constant 0 : index
    %c110_92 = arith.constant 110 : index
    %117 = vector.load %arg0[%c2_90, %c0_91, %c110_92] : memref<3x6x640xf32, #tpu.memory_space<vmem>>, vector<1x6x384xf32>
    %118 = vector.shape_cast %117 : vector<1x6x384xf32> to vector<6x384xf32>
    %119 = arith.mulf %116, %118 : vector<6x384xf32>
    %120 = arith.addf %114, %119 : vector<6x384xf32>
    %c20 = arith.constant 20 : index
    %c0_93 = arith.constant 0 : index
    %c0_94 = arith.constant 0 : index
    %121 = vector.load %arg2[%c20, %c0_93, %c0_94] : memref<27x6x384xf32, #tpu.memory_space<vmem>>, vector<1x6x384xf32>
    %122 = vector.shape_cast %121 : vector<1x6x384xf32> to vector<6x384xf32>
    %c2_95 = arith.constant 2 : index
    %c0_96 = arith.constant 0 : index
    %c111_97 = arith.constant 111 : index
    %123 = vector.load %arg0[%c2_95, %c0_96, %c111_97] : memref<3x6x640xf32, #tpu.memory_space<vmem>>, vector<1x6x384xf32>
    %124 = vector.shape_cast %123 : vector<1x6x384xf32> to vector<6x384xf32>
    %125 = arith.mulf %122, %124 : vector<6x384xf32>
    %126 = arith.addf %120, %125 : vector<6x384xf32>
    %c21 = arith.constant 21 : index
    %c0_98 = arith.constant 0 : index
    %c0_99 = arith.constant 0 : index
    %127 = vector.load %arg2[%c21, %c0_98, %c0_99] : memref<27x6x384xf32, #tpu.memory_space<vmem>>, vector<1x6x384xf32>
    %128 = vector.shape_cast %127 : vector<1x6x384xf32> to vector<6x384xf32>
    %c2_100 = arith.constant 2 : index
    %c0_101 = arith.constant 0 : index
    %c127_102 = arith.constant 127 : index
    %129 = vector.load %arg0[%c2_100, %c0_101, %c127_102] : memref<3x6x640xf32, #tpu.memory_space<vmem>>, vector<1x6x384xf32>
    %130 = vector.shape_cast %129 : vector<1x6x384xf32> to vector<6x384xf32>
    %131 = arith.mulf %128, %130 : vector<6x384xf32>
    %132 = arith.addf %126, %131 : vector<6x384xf32>
    %c22 = arith.constant 22 : index
    %c0_103 = arith.constant 0 : index
    %c0_104 = arith.constant 0 : index
    %133 = vector.load %arg2[%c22, %c0_103, %c0_104] : memref<27x6x384xf32, #tpu.memory_space<vmem>>, vector<1x6x384xf32>
    %134 = vector.shape_cast %133 : vector<1x6x384xf32> to vector<6x384xf32>
    %c2_105 = arith.constant 2 : index
    %c0_106 = arith.constant 0 : index
    %c128_107 = arith.constant 128 : index
    %135 = vector.load %arg0[%c2_105, %c0_106, %c128_107] : memref<3x6x640xf32, #tpu.memory_space<vmem>>, vector<1x6x384xf32>
    %136 = vector.shape_cast %135 : vector<1x6x384xf32> to vector<6x384xf32>
    %137 = arith.mulf %134, %136 : vector<6x384xf32>
    %138 = arith.addf %132, %137 : vector<6x384xf32>
    %c23 = arith.constant 23 : index
    %c0_108 = arith.constant 0 : index
    %c0_109 = arith.constant 0 : index
    %139 = vector.load %arg2[%c23, %c0_108, %c0_109] : memref<27x6x384xf32, #tpu.memory_space<vmem>>, vector<1x6x384xf32>
    %140 = vector.shape_cast %139 : vector<1x6x384xf32> to vector<6x384xf32>
    %c2_110 = arith.constant 2 : index
    %c0_111 = arith.constant 0 : index
    %c129_112 = arith.constant 129 : index
    %141 = vector.load %arg0[%c2_110, %c0_111, %c129_112] : memref<3x6x640xf32, #tpu.memory_space<vmem>>, vector<1x6x384xf32>
    %142 = vector.shape_cast %141 : vector<1x6x384xf32> to vector<6x384xf32>
    %143 = arith.mulf %140, %142 : vector<6x384xf32>
    %144 = arith.addf %138, %143 : vector<6x384xf32>
    %c24 = arith.constant 24 : index
    %c0_113 = arith.constant 0 : index
    %c0_114 = arith.constant 0 : index
    %145 = vector.load %arg2[%c24, %c0_113, %c0_114] : memref<27x6x384xf32, #tpu.memory_space<vmem>>, vector<1x6x384xf32>
    %146 = vector.shape_cast %145 : vector<1x6x384xf32> to vector<6x384xf32>
    %c2_115 = arith.constant 2 : index
    %c0_116 = arith.constant 0 : index
    %c145_117 = arith.constant 145 : index
    %147 = vector.load %arg0[%c2_115, %c0_116, %c145_117] : memref<3x6x640xf32, #tpu.memory_space<vmem>>, vector<1x6x384xf32>
    %148 = vector.shape_cast %147 : vector<1x6x384xf32> to vector<6x384xf32>
    %149 = arith.mulf %146, %148 : vector<6x384xf32>
    %150 = arith.addf %144, %149 : vector<6x384xf32>
    %c25 = arith.constant 25 : index
    %c0_118 = arith.constant 0 : index
    %c0_119 = arith.constant 0 : index
    %151 = vector.load %arg2[%c25, %c0_118, %c0_119] : memref<27x6x384xf32, #tpu.memory_space<vmem>>, vector<1x6x384xf32>
    %152 = vector.shape_cast %151 : vector<1x6x384xf32> to vector<6x384xf32>
    %c2_120 = arith.constant 2 : index
    %c0_121 = arith.constant 0 : index
    %c146_122 = arith.constant 146 : index
    %153 = vector.load %arg0[%c2_120, %c0_121, %c146_122] : memref<3x6x640xf32, #tpu.memory_space<vmem>>, vector<1x6x384xf32>
    %154 = vector.shape_cast %153 : vector<1x6x384xf32> to vector<6x384xf32>
    %155 = arith.mulf %152, %154 : vector<6x384xf32>
    %156 = arith.addf %150, %155 : vector<6x384xf32>
    %c26 = arith.constant 26 : index
    %c0_123 = arith.constant 0 : index
    %c0_124 = arith.constant 0 : index
    %157 = vector.load %arg2[%c26, %c0_123, %c0_124] : memref<27x6x384xf32, #tpu.memory_space<vmem>>, vector<1x6x384xf32>
    %158 = vector.shape_cast %157 : vector<1x6x384xf32> to vector<6x384xf32>
    %c2_125 = arith.constant 2 : index
    %c0_126 = arith.constant 0 : index
    %c147_127 = arith.constant 147 : index
    %159 = vector.load %arg0[%c2_125, %c0_126, %c147_127] : memref<3x6x640xf32, #tpu.memory_space<vmem>>, vector<1x6x384xf32>
    %160 = vector.shape_cast %159 : vector<1x6x384xf32> to vector<6x384xf32>
    %161 = arith.mulf %158, %160 : vector<6x384xf32>
    %162 = arith.addf %156, %161 : vector<6x384xf32>
    %cst = arith.constant 0.000000e+00 : f32
    %163 = vector.broadcast %cst : f32 to vector<6x384xf32>
    %164 = arith.maximumf %162, %163 : vector<6x384xf32>
    %c0_128 = arith.constant 0 : index
    %c0_129 = arith.constant 0 : index
    %165 = vector.load %arg6[%c0_128, %c0_129] : memref<6x384xf32, #tpu.memory_space<vmem>>, vector<6x384xf32>
    %166 = arith.mulf %164, %165 : vector<6x384xf32>
    %cst_130 = arith.constant 0.000000e+00 : f32
    %167 = vector.broadcast %cst_130 : f32 to vector<3x6x640xf32>
    %c0_131 = arith.constant 0 : index
    %c0_132 = arith.constant 0 : index
    %c0_133 = arith.constant 0 : index
    %168 = vector.load %arg8[%c0_131, %c0_132, %c0_133] : memref<3x6x640xf32, #tpu.memory_space<vmem>>, vector<3x6x640xf32>
    tpu.vector_store %arg8[%c0_131, %c0_132, %c0_133], %167 {strides = array<i32>} : memref<3x6x640xf32, #tpu.memory_space<vmem>>, vector<3x6x640xf32>,
    %169 = vector.extract_strided_slice %166 {offsets = [0, 0], sizes = [2, 384], strides = [1, 1]} : vector<6x384xf32> to vector<2x384xf32>
    %170 = tpu.concatenate %169, %169, %169 in 0 : vector<2x384xf32>, vector<2x384xf32>, vector<2x384xf32> -> vector<6x384xf32>
    %c0_134 = arith.constant 0 : index
    %c0_135 = arith.constant 0 : index
    %c128_136 = arith.constant 128 : index
    %171 = vector.load %arg8[%c0_134, %c0_135, %c128_136] : memref<3x6x640xf32, #tpu.memory_space<vmem>>, vector<1x6x384xf32>
    %172 = vector.shape_cast %171 : vector<1x6x384xf32> to vector<6x384xf32>
    %173 = vector.shape_cast %170 : vector<6x384xf32> to vector<1x6x384xf32>
    tpu.vector_store %arg8[%c0_134, %c0_135, %c128_136], %173 {strides = array<i32>} : memref<3x6x640xf32, #tpu.memory_space<vmem>>, vector<1x6x384xf32>,
    %174 = vector.extract_strided_slice %166 {offsets = [2, 0], sizes = [2, 384], strides = [1, 1]} : vector<6x384xf32> to vector<2x384xf32>
    %175 = tpu.concatenate %174, %174, %174 in 0 : vector<2x384xf32>, vector<2x384xf32>, vector<2x384xf32> -> vector<6x384xf32>
    %c1_137 = arith.constant 1 : index
    %c0_138 = arith.constant 0 : index
    %c128_139 = arith.constant 128 : index
    %176 = vector.load %arg8[%c1_137, %c0_138, %c128_139] : memref<3x6x640xf32, #tpu.memory_space<vmem>>, vector<1x6x384xf32>
    %177 = vector.shape_cast %176 : vector<1x6x384xf32> to vector<6x384xf32>
    %178 = vector.shape_cast %175 : vector<6x384xf32> to vector<1x6x384xf32>
    tpu.vector_store %arg8[%c1_137, %c0_138, %c128_139], %178 {strides = array<i32>} : memref<3x6x640xf32, #tpu.memory_space<vmem>>, vector<1x6x384xf32>,
    %179 = vector.extract_strided_slice %166 {offsets = [4, 0], sizes = [2, 384], strides = [1, 1]} : vector<6x384xf32> to vector<2x384xf32>
    %180 = tpu.concatenate %179, %179, %179 in 0 : vector<2x384xf32>, vector<2x384xf32>, vector<2x384xf32> -> vector<6x384xf32>
    %c2_140 = arith.constant 2 : index
    %c0_141 = arith.constant 0 : index
    %c128_142 = arith.constant 128 : index
    %181 = vector.load %arg8[%c2_140, %c0_141, %c128_142] : memref<3x6x640xf32, #tpu.memory_space<vmem>>, vector<1x6x384xf32>
    %182 = vector.shape_cast %181 : vector<1x6x384xf32> to vector<6x384xf32>
    %183 = vector.shape_cast %180 : vector<6x384xf32> to vector<1x6x384xf32>
    tpu.vector_store %arg8[%c2_140, %c0_141, %c128_142], %183 {strides = array<i32>} : memref<3x6x640xf32, #tpu.memory_space<vmem>>, vector<1x6x384xf32>,
    %c0_143 = arith.constant 0 : index
    %c0_144 = arith.constant 0 : index
    %184 = vector.load %arg5[%c0_143, %c0_144] : memref<6x384xf32, #tpu.memory_space<vmem>>, vector<6x384xf32>
    %c0_145 = arith.constant 0 : index
    %c0_146 = arith.constant 0 : index
    %c0_147 = arith.constant 0 : index
    %185 = vector.load %arg4[%c0_145, %c0_146, %c0_147] : memref<27x6x384xf32, #tpu.memory_space<vmem>>, vector<1x6x384xf32>
    %186 = vector.shape_cast %185 : vector<1x6x384xf32> to vector<6x384xf32>
    %c0_148 = arith.constant 0 : index
    %c0_149 = arith.constant 0 : index
    %c109_150 = arith.constant 109 : index
    %187 = vector.load %arg8[%c0_148, %c0_149, %c109_150] : memref<3x6x640xf32, #tpu.memory_space<vmem>>, vector<1x6x384xf32>
    %188 = vector.shape_cast %187 : vector<1x6x384xf32> to vector<6x384xf32>
    %189 = arith.mulf %186, %188 : vector<6x384xf32>
    %190 = arith.addf %184, %189 : vector<6x384xf32>
    %c1_151 = arith.constant 1 : index
    %c0_152 = arith.constant 0 : index
    %c0_153 = arith.constant 0 : index
    %191 = vector.load %arg4[%c1_151, %c0_152, %c0_153] : memref<27x6x384xf32, #tpu.memory_space<vmem>>, vector<1x6x384xf32>
    %192 = vector.shape_cast %191 : vector<1x6x384xf32> to vector<6x384xf32>
    %c0_154 = arith.constant 0 : index
    %c0_155 = arith.constant 0 : index
    %c110_156 = arith.constant 110 : index
    %193 = vector.load %arg8[%c0_154, %c0_155, %c110_156] : memref<3x6x640xf32, #tpu.memory_space<vmem>>, vector<1x6x384xf32>
    %194 = vector.shape_cast %193 : vector<1x6x384xf32> to vector<6x384xf32>
    %195 = arith.mulf %192, %194 : vector<6x384xf32>
    %196 = arith.addf %190, %195 : vector<6x384xf32>
    %c2_157 = arith.constant 2 : index
    %c0_158 = arith.constant 0 : index
    %c0_159 = arith.constant 0 : index
    %197 = vector.load %arg4[%c2_157, %c0_158, %c0_159] : memref<27x6x384xf32, #tpu.memory_space<vmem>>, vector<1x6x384xf32>
    %198 = vector.shape_cast %197 : vector<1x6x384xf32> to vector<6x384xf32>
    %c0_160 = arith.constant 0 : index
    %c0_161 = arith.constant 0 : index
    %c111_162 = arith.constant 111 : index
    %199 = vector.load %arg8[%c0_160, %c0_161, %c111_162] : memref<3x6x640xf32, #tpu.memory_space<vmem>>, vector<1x6x384xf32>
    %200 = vector.shape_cast %199 : vector<1x6x384xf32> to vector<6x384xf32>
    %201 = arith.mulf %198, %200 : vector<6x384xf32>
    %202 = arith.addf %196, %201 : vector<6x384xf32>
    %c3_163 = arith.constant 3 : index
    %c0_164 = arith.constant 0 : index
    %c0_165 = arith.constant 0 : index
    %203 = vector.load %arg4[%c3_163, %c0_164, %c0_165] : memref<27x6x384xf32, #tpu.memory_space<vmem>>, vector<1x6x384xf32>
    %204 = vector.shape_cast %203 : vector<1x6x384xf32> to vector<6x384xf32>
    %c0_166 = arith.constant 0 : index
    %c0_167 = arith.constant 0 : index
    %c127_168 = arith.constant 127 : index
    %205 = vector.load %arg8[%c0_166, %c0_167, %c127_168] : memref<3x6x640xf32, #tpu.memory_space<vmem>>, vector<1x6x384xf32>
    %206 = vector.shape_cast %205 : vector<1x6x384xf32> to vector<6x384xf32>
    %207 = arith.mulf %204, %206 : vector<6x384xf32>
    %208 = arith.addf %202, %207 : vector<6x384xf32>
    %c4_169 = arith.constant 4 : index
    %c0_170 = arith.constant 0 : index
    %c0_171 = arith.constant 0 : index
    %209 = vector.load %arg4[%c4_169, %c0_170, %c0_171] : memref<27x6x384xf32, #tpu.memory_space<vmem>>, vector<1x6x384xf32>
    %210 = vector.shape_cast %209 : vector<1x6x384xf32> to vector<6x384xf32>
    %c0_172 = arith.constant 0 : index
    %c0_173 = arith.constant 0 : index
    %c128_174 = arith.constant 128 : index
    %211 = vector.load %arg8[%c0_172, %c0_173, %c128_174] : memref<3x6x640xf32, #tpu.memory_space<vmem>>, vector<1x6x384xf32>
    %212 = vector.shape_cast %211 : vector<1x6x384xf32> to vector<6x384xf32>
    %213 = arith.mulf %210, %212 : vector<6x384xf32>
    %214 = arith.addf %208, %213 : vector<6x384xf32>
    %c5_175 = arith.constant 5 : index
    %c0_176 = arith.constant 0 : index
    %c0_177 = arith.constant 0 : index
    %215 = vector.load %arg4[%c5_175, %c0_176, %c0_177] : memref<27x6x384xf32, #tpu.memory_space<vmem>>, vector<1x6x384xf32>
    %216 = vector.shape_cast %215 : vector<1x6x384xf32> to vector<6x384xf32>
    %c0_178 = arith.constant 0 : index
    %c0_179 = arith.constant 0 : index
    %c129_180 = arith.constant 129 : index
    %217 = vector.load %arg8[%c0_178, %c0_179, %c129_180] : memref<3x6x640xf32, #tpu.memory_space<vmem>>, vector<1x6x384xf32>
    %218 = vector.shape_cast %217 : vector<1x6x384xf32> to vector<6x384xf32>
    %219 = arith.mulf %216, %218 : vector<6x384xf32>
    %220 = arith.addf %214, %219 : vector<6x384xf32>
    %c6_181 = arith.constant 6 : index
    %c0_182 = arith.constant 0 : index
    %c0_183 = arith.constant 0 : index
    %221 = vector.load %arg4[%c6_181, %c0_182, %c0_183] : memref<27x6x384xf32, #tpu.memory_space<vmem>>, vector<1x6x384xf32>
    %222 = vector.shape_cast %221 : vector<1x6x384xf32> to vector<6x384xf32>
    %c0_184 = arith.constant 0 : index
    %c0_185 = arith.constant 0 : index
    %c145_186 = arith.constant 145 : index
    %223 = vector.load %arg8[%c0_184, %c0_185, %c145_186] : memref<3x6x640xf32, #tpu.memory_space<vmem>>, vector<1x6x384xf32>
    %224 = vector.shape_cast %223 : vector<1x6x384xf32> to vector<6x384xf32>
    %225 = arith.mulf %222, %224 : vector<6x384xf32>
    %226 = arith.addf %220, %225 : vector<6x384xf32>
    %c7_187 = arith.constant 7 : index
    %c0_188 = arith.constant 0 : index
    %c0_189 = arith.constant 0 : index
    %227 = vector.load %arg4[%c7_187, %c0_188, %c0_189] : memref<27x6x384xf32, #tpu.memory_space<vmem>>, vector<1x6x384xf32>
    %228 = vector.shape_cast %227 : vector<1x6x384xf32> to vector<6x384xf32>
    %c0_190 = arith.constant 0 : index
    %c0_191 = arith.constant 0 : index
    %c146_192 = arith.constant 146 : index
    %229 = vector.load %arg8[%c0_190, %c0_191, %c146_192] : memref<3x6x640xf32, #tpu.memory_space<vmem>>, vector<1x6x384xf32>
    %230 = vector.shape_cast %229 : vector<1x6x384xf32> to vector<6x384xf32>
    %231 = arith.mulf %228, %230 : vector<6x384xf32>
    %232 = arith.addf %226, %231 : vector<6x384xf32>
    %c8_193 = arith.constant 8 : index
    %c0_194 = arith.constant 0 : index
    %c0_195 = arith.constant 0 : index
    %233 = vector.load %arg4[%c8_193, %c0_194, %c0_195] : memref<27x6x384xf32, #tpu.memory_space<vmem>>, vector<1x6x384xf32>
    %234 = vector.shape_cast %233 : vector<1x6x384xf32> to vector<6x384xf32>
    %c0_196 = arith.constant 0 : index
    %c0_197 = arith.constant 0 : index
    %c147_198 = arith.constant 147 : index
    %235 = vector.load %arg8[%c0_196, %c0_197, %c147_198] : memref<3x6x640xf32, #tpu.memory_space<vmem>>, vector<1x6x384xf32>
    %236 = vector.shape_cast %235 : vector<1x6x384xf32> to vector<6x384xf32>
    %237 = arith.mulf %234, %236 : vector<6x384xf32>
    %238 = arith.addf %232, %237 : vector<6x384xf32>
    %c9_199 = arith.constant 9 : index
    %c0_200 = arith.constant 0 : index
    %c0_201 = arith.constant 0 : index
    %239 = vector.load %arg4[%c9_199, %c0_200, %c0_201] : memref<27x6x384xf32, #tpu.memory_space<vmem>>, vector<1x6x384xf32>
    %240 = vector.shape_cast %239 : vector<1x6x384xf32> to vector<6x384xf32>
    %c1_202 = arith.constant 1 : index
    %c0_203 = arith.constant 0 : index
    %c109_204 = arith.constant 109 : index
    %241 = vector.load %arg8[%c1_202, %c0_203, %c109_204] : memref<3x6x640xf32, #tpu.memory_space<vmem>>, vector<1x6x384xf32>
    %242 = vector.shape_cast %241 : vector<1x6x384xf32> to vector<6x384xf32>
    %243 = arith.mulf %240, %242 : vector<6x384xf32>
    %244 = arith.addf %238, %243 : vector<6x384xf32>
    %c10_205 = arith.constant 10 : index
    %c0_206 = arith.constant 0 : index
    %c0_207 = arith.constant 0 : index
    %245 = vector.load %arg4[%c10_205, %c0_206, %c0_207] : memref<27x6x384xf32, #tpu.memory_space<vmem>>, vector<1x6x384xf32>
    %246 = vector.shape_cast %245 : vector<1x6x384xf32> to vector<6x384xf32>
    %c1_208 = arith.constant 1 : index
    %c0_209 = arith.constant 0 : index
    %c110_210 = arith.constant 110 : index
    %247 = vector.load %arg8[%c1_208, %c0_209, %c110_210] : memref<3x6x640xf32, #tpu.memory_space<vmem>>, vector<1x6x384xf32>
    %248 = vector.shape_cast %247 : vector<1x6x384xf32> to vector<6x384xf32>
    %249 = arith.mulf %246, %248 : vector<6x384xf32>
    %250 = arith.addf %244, %249 : vector<6x384xf32>
    %c11_211 = arith.constant 11 : index
    %c0_212 = arith.constant 0 : index
    %c0_213 = arith.constant 0 : index
    %251 = vector.load %arg4[%c11_211, %c0_212, %c0_213] : memref<27x6x384xf32, #tpu.memory_space<vmem>>, vector<1x6x384xf32>
    %252 = vector.shape_cast %251 : vector<1x6x384xf32> to vector<6x384xf32>
    %c1_214 = arith.constant 1 : index
    %c0_215 = arith.constant 0 : index
    %c111_216 = arith.constant 111 : index
    %253 = vector.load %arg8[%c1_214, %c0_215, %c111_216] : memref<3x6x640xf32, #tpu.memory_space<vmem>>, vector<1x6x384xf32>
    %254 = vector.shape_cast %253 : vector<1x6x384xf32> to vector<6x384xf32>
    %255 = arith.mulf %252, %254 : vector<6x384xf32>
    %256 = arith.addf %250, %255 : vector<6x384xf32>
    %c12_217 = arith.constant 12 : index
    %c0_218 = arith.constant 0 : index
    %c0_219 = arith.constant 0 : index
    %257 = vector.load %arg4[%c12_217, %c0_218, %c0_219] : memref<27x6x384xf32, #tpu.memory_space<vmem>>, vector<1x6x384xf32>
    %258 = vector.shape_cast %257 : vector<1x6x384xf32> to vector<6x384xf32>
    %c1_220 = arith.constant 1 : index
    %c0_221 = arith.constant 0 : index
    %c127_222 = arith.constant 127 : index
    %259 = vector.load %arg8[%c1_220, %c0_221, %c127_222] : memref<3x6x640xf32, #tpu.memory_space<vmem>>, vector<1x6x384xf32>
    %260 = vector.shape_cast %259 : vector<1x6x384xf32> to vector<6x384xf32>
    %261 = arith.mulf %258, %260 : vector<6x384xf32>
    %262 = arith.addf %256, %261 : vector<6x384xf32>
    %c13_223 = arith.constant 13 : index
    %c0_224 = arith.constant 0 : index
    %c0_225 = arith.constant 0 : index
    %263 = vector.load %arg4[%c13_223, %c0_224, %c0_225] : memref<27x6x384xf32, #tpu.memory_space<vmem>>, vector<1x6x384xf32>
    %264 = vector.shape_cast %263 : vector<1x6x384xf32> to vector<6x384xf32>
    %c1_226 = arith.constant 1 : index
    %c0_227 = arith.constant 0 : index
    %c128_228 = arith.constant 128 : index
    %265 = vector.load %arg8[%c1_226, %c0_227, %c128_228] : memref<3x6x640xf32, #tpu.memory_space<vmem>>, vector<1x6x384xf32>
    %266 = vector.shape_cast %265 : vector<1x6x384xf32> to vector<6x384xf32>
    %267 = arith.mulf %264, %266 : vector<6x384xf32>
    %268 = arith.addf %262, %267 : vector<6x384xf32>
    %c14_229 = arith.constant 14 : index
    %c0_230 = arith.constant 0 : index
    %c0_231 = arith.constant 0 : index
    %269 = vector.load %arg4[%c14_229, %c0_230, %c0_231] : memref<27x6x384xf32, #tpu.memory_space<vmem>>, vector<1x6x384xf32>
    %270 = vector.shape_cast %269 : vector<1x6x384xf32> to vector<6x384xf32>
    %c1_232 = arith.constant 1 : index
    %c0_233 = arith.constant 0 : index
    %c129_234 = arith.constant 129 : index
    %271 = vector.load %arg8[%c1_232, %c0_233, %c129_234] : memref<3x6x640xf32, #tpu.memory_space<vmem>>, vector<1x6x384xf32>
    %272 = vector.shape_cast %271 : vector<1x6x384xf32> to vector<6x384xf32>
    %273 = arith.mulf %270, %272 : vector<6x384xf32>
    %274 = arith.addf %268, %273 : vector<6x384xf32>
    %c15_235 = arith.constant 15 : index
    %c0_236 = arith.constant 0 : index
    %c0_237 = arith.constant 0 : index
    %275 = vector.load %arg4[%c15_235, %c0_236, %c0_237] : memref<27x6x384xf32, #tpu.memory_space<vmem>>, vector<1x6x384xf32>
    %276 = vector.shape_cast %275 : vector<1x6x384xf32> to vector<6x384xf32>
    %c1_238 = arith.constant 1 : index
    %c0_239 = arith.constant 0 : index
    %c145_240 = arith.constant 145 : index
    %277 = vector.load %arg8[%c1_238, %c0_239, %c145_240] : memref<3x6x640xf32, #tpu.memory_space<vmem>>, vector<1x6x384xf32>
    %278 = vector.shape_cast %277 : vector<1x6x384xf32> to vector<6x384xf32>
    %279 = arith.mulf %276, %278 : vector<6x384xf32>
    %280 = arith.addf %274, %279 : vector<6x384xf32>
    %c16_241 = arith.constant 16 : index
    %c0_242 = arith.constant 0 : index
    %c0_243 = arith.constant 0 : index
    %281 = vector.load %arg4[%c16_241, %c0_242, %c0_243] : memref<27x6x384xf32, #tpu.memory_space<vmem>>, vector<1x6x384xf32>
    %282 = vector.shape_cast %281 : vector<1x6x384xf32> to vector<6x384xf32>
    %c1_244 = arith.constant 1 : index
    %c0_245 = arith.constant 0 : index
    %c146_246 = arith.constant 146 : index
    %283 = vector.load %arg8[%c1_244, %c0_245, %c146_246] : memref<3x6x640xf32, #tpu.memory_space<vmem>>, vector<1x6x384xf32>
    %284 = vector.shape_cast %283 : vector<1x6x384xf32> to vector<6x384xf32>
    %285 = arith.mulf %282, %284 : vector<6x384xf32>
    %286 = arith.addf %280, %285 : vector<6x384xf32>
    %c17_247 = arith.constant 17 : index
    %c0_248 = arith.constant 0 : index
    %c0_249 = arith.constant 0 : index
    %287 = vector.load %arg4[%c17_247, %c0_248, %c0_249] : memref<27x6x384xf32, #tpu.memory_space<vmem>>, vector<1x6x384xf32>
    %288 = vector.shape_cast %287 : vector<1x6x384xf32> to vector<6x384xf32>
    %c1_250 = arith.constant 1 : index
    %c0_251 = arith.constant 0 : index
    %c147_252 = arith.constant 147 : index
    %289 = vector.load %arg8[%c1_250, %c0_251, %c147_252] : memref<3x6x640xf32, #tpu.memory_space<vmem>>, vector<1x6x384xf32>
    %290 = vector.shape_cast %289 : vector<1x6x384xf32> to vector<6x384xf32>
    %291 = arith.mulf %288, %290 : vector<6x384xf32>
    %292 = arith.addf %286, %291 : vector<6x384xf32>
    %c18_253 = arith.constant 18 : index
    %c0_254 = arith.constant 0 : index
    %c0_255 = arith.constant 0 : index
    %293 = vector.load %arg4[%c18_253, %c0_254, %c0_255] : memref<27x6x384xf32, #tpu.memory_space<vmem>>, vector<1x6x384xf32>
    %294 = vector.shape_cast %293 : vector<1x6x384xf32> to vector<6x384xf32>
    %c2_256 = arith.constant 2 : index
    %c0_257 = arith.constant 0 : index
    %c109_258 = arith.constant 109 : index
    %295 = vector.load %arg8[%c2_256, %c0_257, %c109_258] : memref<3x6x640xf32, #tpu.memory_space<vmem>>, vector<1x6x384xf32>
    %296 = vector.shape_cast %295 : vector<1x6x384xf32> to vector<6x384xf32>
    %297 = arith.mulf %294, %296 : vector<6x384xf32>
    %298 = arith.addf %292, %297 : vector<6x384xf32>
    %c19_259 = arith.constant 19 : index
    %c0_260 = arith.constant 0 : index
    %c0_261 = arith.constant 0 : index
    %299 = vector.load %arg4[%c19_259, %c0_260, %c0_261] : memref<27x6x384xf32, #tpu.memory_space<vmem>>, vector<1x6x384xf32>
    %300 = vector.shape_cast %299 : vector<1x6x384xf32> to vector<6x384xf32>
    %c2_262 = arith.constant 2 : index
    %c0_263 = arith.constant 0 : index
    %c110_264 = arith.constant 110 : index
    %301 = vector.load %arg8[%c2_262, %c0_263, %c110_264] : memref<3x6x640xf32, #tpu.memory_space<vmem>>, vector<1x6x384xf32>
    %302 = vector.shape_cast %301 : vector<1x6x384xf32> to vector<6x384xf32>
    %303 = arith.mulf %300, %302 : vector<6x384xf32>
    %304 = arith.addf %298, %303 : vector<6x384xf32>
    %c20_265 = arith.constant 20 : index
    %c0_266 = arith.constant 0 : index
    %c0_267 = arith.constant 0 : index
    %305 = vector.load %arg4[%c20_265, %c0_266, %c0_267] : memref<27x6x384xf32, #tpu.memory_space<vmem>>, vector<1x6x384xf32>
    %306 = vector.shape_cast %305 : vector<1x6x384xf32> to vector<6x384xf32>
    %c2_268 = arith.constant 2 : index
    %c0_269 = arith.constant 0 : index
    %c111_270 = arith.constant 111 : index
    %307 = vector.load %arg8[%c2_268, %c0_269, %c111_270] : memref<3x6x640xf32, #tpu.memory_space<vmem>>, vector<1x6x384xf32>
    %308 = vector.shape_cast %307 : vector<1x6x384xf32> to vector<6x384xf32>
    %309 = arith.mulf %306, %308 : vector<6x384xf32>
    %310 = arith.addf %304, %309 : vector<6x384xf32>
    %c21_271 = arith.constant 21 : index
    %c0_272 = arith.constant 0 : index
    %c0_273 = arith.constant 0 : index
    %311 = vector.load %arg4[%c21_271, %c0_272, %c0_273] : memref<27x6x384xf32, #tpu.memory_space<vmem>>, vector<1x6x384xf32>
    %312 = vector.shape_cast %311 : vector<1x6x384xf32> to vector<6x384xf32>
    %c2_274 = arith.constant 2 : index
    %c0_275 = arith.constant 0 : index
    %c127_276 = arith.constant 127 : index
    %313 = vector.load %arg8[%c2_274, %c0_275, %c127_276] : memref<3x6x640xf32, #tpu.memory_space<vmem>>, vector<1x6x384xf32>
    %314 = vector.shape_cast %313 : vector<1x6x384xf32> to vector<6x384xf32>
    %315 = arith.mulf %312, %314 : vector<6x384xf32>
    %316 = arith.addf %310, %315 : vector<6x384xf32>
    %c22_277 = arith.constant 22 : index
    %c0_278 = arith.constant 0 : index
    %c0_279 = arith.constant 0 : index
    %317 = vector.load %arg4[%c22_277, %c0_278, %c0_279] : memref<27x6x384xf32, #tpu.memory_space<vmem>>, vector<1x6x384xf32>
    %318 = vector.shape_cast %317 : vector<1x6x384xf32> to vector<6x384xf32>
    %c2_280 = arith.constant 2 : index
    %c0_281 = arith.constant 0 : index
    %c128_282 = arith.constant 128 : index
    %319 = vector.load %arg8[%c2_280, %c0_281, %c128_282] : memref<3x6x640xf32, #tpu.memory_space<vmem>>, vector<1x6x384xf32>
    %320 = vector.shape_cast %319 : vector<1x6x384xf32> to vector<6x384xf32>
    %321 = arith.mulf %318, %320 : vector<6x384xf32>
    %322 = arith.addf %316, %321 : vector<6x384xf32>
    %c23_283 = arith.constant 23 : index
    %c0_284 = arith.constant 0 : index
    %c0_285 = arith.constant 0 : index
    %323 = vector.load %arg4[%c23_283, %c0_284, %c0_285] : memref<27x6x384xf32, #tpu.memory_space<vmem>>, vector<1x6x384xf32>
    %324 = vector.shape_cast %323 : vector<1x6x384xf32> to vector<6x384xf32>
    %c2_286 = arith.constant 2 : index
    %c0_287 = arith.constant 0 : index
    %c129_288 = arith.constant 129 : index
    %325 = vector.load %arg8[%c2_286, %c0_287, %c129_288] : memref<3x6x640xf32, #tpu.memory_space<vmem>>, vector<1x6x384xf32>
    %326 = vector.shape_cast %325 : vector<1x6x384xf32> to vector<6x384xf32>
    %327 = arith.mulf %324, %326 : vector<6x384xf32>
    %328 = arith.addf %322, %327 : vector<6x384xf32>
    %c24_289 = arith.constant 24 : index
    %c0_290 = arith.constant 0 : index
    %c0_291 = arith.constant 0 : index
    %329 = vector.load %arg4[%c24_289, %c0_290, %c0_291] : memref<27x6x384xf32, #tpu.memory_space<vmem>>, vector<1x6x384xf32>
    %330 = vector.shape_cast %329 : vector<1x6x384xf32> to vector<6x384xf32>
    %c2_292 = arith.constant 2 : index
    %c0_293 = arith.constant 0 : index
    %c145_294 = arith.constant 145 : index
    %331 = vector.load %arg8[%c2_292, %c0_293, %c145_294] : memref<3x6x640xf32, #tpu.memory_space<vmem>>, vector<1x6x384xf32>
    %332 = vector.shape_cast %331 : vector<1x6x384xf32> to vector<6x384xf32>
    %333 = arith.mulf %330, %332 : vector<6x384xf32>
    %334 = arith.addf %328, %333 : vector<6x384xf32>
    %c25_295 = arith.constant 25 : index
    %c0_296 = arith.constant 0 : index
    %c0_297 = arith.constant 0 : index
    %335 = vector.load %arg4[%c25_295, %c0_296, %c0_297] : memref<27x6x384xf32, #tpu.memory_space<vmem>>, vector<1x6x384xf32>
    %336 = vector.shape_cast %335 : vector<1x6x384xf32> to vector<6x384xf32>
    %c2_298 = arith.constant 2 : index
    %c0_299 = arith.constant 0 : index
    %c146_300 = arith.constant 146 : index
    %337 = vector.load %arg8[%c2_298, %c0_299, %c146_300] : memref<3x6x640xf32, #tpu.memory_space<vmem>>, vector<1x6x384xf32>
    %338 = vector.shape_cast %337 : vector<1x6x384xf32> to vector<6x384xf32>
    %339 = arith.mulf %336, %338 : vector<6x384xf32>
    %340 = arith.addf %334, %339 : vector<6x384xf32>
    %c26_301 = arith.constant 26 : index
    %c0_302 = arith.constant 0 : index
    %c0_303 = arith.constant 0 : index
    %341 = vector.load %arg4[%c26_301, %c0_302, %c0_303] : memref<27x6x384xf32, #tpu.memory_space<vmem>>, vector<1x6x384xf32>
    %342 = vector.shape_cast %341 : vector<1x6x384xf32> to vector<6x384xf32>
    %c2_304 = arith.constant 2 : index
    %c0_305 = arith.constant 0 : index
    %c147_306 = arith.constant 147 : index
    %343 = vector.load %arg8[%c2_304, %c0_305, %c147_306] : memref<3x6x640xf32, #tpu.memory_space<vmem>>, vector<1x6x384xf32>
    %344 = vector.shape_cast %343 : vector<1x6x384xf32> to vector<6x384xf32>
    %345 = arith.mulf %342, %344 : vector<6x384xf32>
    %346 = arith.addf %340, %345 : vector<6x384xf32>
    %cst_307 = arith.constant 0.000000e+00 : f32
    %347 = vector.broadcast %cst_307 : f32 to vector<6x384xf32>
    %348 = arith.maximumf %346, %347 : vector<6x384xf32>
    %c0_308 = arith.constant 0 : index
    %c0_309 = arith.constant 0 : index
    %349 = vector.load %arg1[%c0_308, %c0_309] : memref<6x384xf32, #tpu.memory_space<vmem>>, vector<6x384xf32>
    %350 = arith.addf %348, %349 : vector<6x384xf32>
    %c0_310 = arith.constant 0 : index
    %c0_311 = arith.constant 0 : index
    %351 = vector.load %arg7[%c0_310, %c0_311] : memref<6x384xf32, #tpu.memory_space<vmem>>, vector<6x384xf32>
    tpu.vector_store %arg7[%c0_310, %c0_311], %350 {strides = array<i32>} : memref<6x384xf32, #tpu.memory_space<vmem>>, vector<6x384xf32>,
    return
  }
}

</mosaic_0001>

<llo_original>
// kernel: simple_residual_block.1
$region0: #{simple_residual_block.1}
  #allocation0 [shape = 'u32[]', space=smem, size = 0x4, offset = 0x4, fixed_abs, tag = 'smem constant byte address 0x4 - core index']
  #allocation1 [shape = 'u32[144,128]{1,0:T(1,128)}', space=vmem, size = 0x12000, scoped, tag = 'internal scratch']
  #allocation2 [shape = 'f32[3,6,640]{2,1,0:T(8,128)}', space=vmem, size = 0xf000, scoped, tag = 'scratch operand']
  %s0 = inlined_call_operand.vmem [shape: f32[3,6,640], index: 0, kind: input, shape index: {}]
  %s1 = inlined_call_operand.vmem [shape: f32[6,384], index: 1, kind: input, shape index: {}]
  %s2 = inlined_call_operand.vmem [shape: f32[27,6,384], index: 2, kind: input, shape index: {}]
  %s3 = inlined_call_operand.vmem [shape: f32[6,384], index: 3, kind: input, shape index: {}]
  %s4 = inlined_call_operand.vmem [shape: f32[27,6,384], index: 4, kind: input, shape index: {}]
  %s5 = inlined_call_operand.vmem [shape: f32[6,384], index: 5, kind: input, shape index: {}]
  %s6 = inlined_call_operand.vmem [shape: f32[6,384], index: 6, kind: input, shape index: {}]
  %s7 = inlined_call_operand.vmem [shape: f32[6,384], index: 7, kind: output, shape index: {}]
  %s8 = sld [smem:[#allocation0]]
  $region38: #{simple_residual_block.1} parent=0
    _
  %s10 = ssub.s32 1, %s8
  %s11 = scalar_select 0, %s10, %s8
  // Predicated region
  $region2: #{simple_residual_block.1} parent=0 // pred_check
    _
  $region3: #{simple_residual_block.1} parent=0 // pred_check_branch
    %13 = sbr.rel (0) target = $region5
  $region4: #{simple_residual_block.1} parent=0 // pred_region
    _
  $region5: #{simple_residual_block.1} parent=0 // pred_fallthru
    _
  // Predicated region
  $region6: #{simple_residual_block.1} parent=0 // pred_check
    _
  $region7: #{simple_residual_block.1} parent=0 // pred_check_branch
    %15 = sbr.rel (0) target = $region9
  $region8: #{simple_residual_block.1} parent=0 // pred_region
    _
  $region9: #{simple_residual_block.1} parent=0 // pred_fallthru
    _
  // Predicated region
  $region10: #{simple_residual_block.1} parent=0 // pred_check
    _
  $region11: #{simple_residual_block.1} parent=0 // pred_check_branch
    %17 = sbr.rel (0) target = $region13
  $region12: #{simple_residual_block.1} parent=0 // pred_region
    _
  $region13: #{simple_residual_block.1} parent=0 // pred_fallthru
    _
  // Predicated region
  $region14: #{simple_residual_block.1} parent=0 // pred_check
    _
  $region15: #{simple_residual_block.1} parent=0 // pred_check_branch
    %19 = sbr.rel (0) target = $region17
  $region16: #{simple_residual_block.1} parent=0 // pred_region
    _
  $region17: #{simple_residual_block.1} parent=0 // pred_fallthru
    _
  // Predicated region
  $region18: #{simple_residual_block.1} parent=0 // pred_check
    _
  $region19: #{simple_residual_block.1} parent=0 // pred_check_branch
    %21 = sbr.rel (0) target = $region21
  $region20: #{simple_residual_block.1} parent=0 // pred_region
    _
  $region21: #{simple_residual_block.1} parent=0 // pred_fallthru
    _
  // Predicated region
  $region22: #{simple_residual_block.1} parent=0 // pred_check
    _
  $region23: #{simple_residual_block.1} parent=0 // pred_check_branch
    %23 = sbr.rel (0) target = $region25
  $region24: #{simple_residual_block.1} parent=0 // pred_region
    _
  $region25: #{simple_residual_block.1} parent=0 // pred_fallthru
    _
  // Predicated region
  $region26: #{simple_residual_block.1} parent=0 // pred_check
    _
  $region27: #{simple_residual_block.1} parent=0 // pred_check_branch
    %25 = sbr.rel (0) target = $region29
  $region28: #{simple_residual_block.1} parent=0 // pred_region
    _
  $region29: #{simple_residual_block.1} parent=0 // pred_fallthru
    _
  %v26 = vld [vmem:[%s3] sm:$0x3f]
  %v27 = vld [vmem:[%s3 + $0x8] sm:$0x3f]
  %v28 = vld [vmem:[%s3 + $0x10] sm:$0x3f]
  %v29 = vld [vmem:[%s2] sm:$0x3f]
  %v30 = vld [vmem:[%s2 + $0x8] sm:$0x3f]
  %v31 = vld [vmem:[%s2 + $0x10] sm:$0x3f]
  %v32 = vld [vmem:[%s0] sm:$0x3f]
  %v33 = vld [vmem:[%s0 + $0x8] sm:$0x3f]
  %v34 = vld [vmem:[%s0 + $0x10] sm:$0x3f]
  %v35 = vld [vmem:[%s0 + $0x18] sm:$0x3f]
  %40 = vrot.lane.b32.xlu0 %v32, 19
  %v41 = vpop.permute.xlu0 %40
  %42 = vrot.lane.b32.xlu0 %v33, 19
  %v43 = vpop.permute.xlu0 %42
  %44 = vrot.lane.b32.xlu0 %v34, 19
  %v45 = vpop.permute.xlu0 %44
  %46 = vrot.lane.b32.xlu0 %v35, 19
  %v47 = vpop.permute.xlu0 %46
  %vm48 = vcmask 154624
  %v49 = vsel %vm48, %v41, %v43
  %v50 = vsel %vm48, %v43, %v45
  %v51 = vsel %vm48, %v45, %v47
  %v55 = vmul.f32 %v29, %v49
  %v56 = vmul.f32 %v30, %v50
  %v57 = vmul.f32 %v31, %v51
  %v58 = vadd.f32 %v26, %v55
  %v59 = vadd.f32 %v27, %v56
  %v60 = vadd.f32 %v28, %v57
  %s61 = scalar_lea.vmem %s2, 24
  %v62 = vld [vmem:[%s61] sm:$0x3f]
  %v63 = vld [vmem:[%s61 + $0x8] sm:$0x3f]
  %v64 = vld [vmem:[%s61 + $0x10] sm:$0x3f]
  %65 = vrot.lane.b32.xlu0 %v32, 18
  %v66 = vpop.permute.xlu0 %65
  %67 = vrot.lane.b32.xlu0 %v33, 18
  %v68 = vpop.permute.xlu0 %67
  %69 = vrot.lane.b32.xlu0 %v34, 18
  %v70 = vpop.permute.xlu0 %69
  %71 = vrot.lane.b32.xlu0 %v35, 18
  %v72 = vpop.permute.xlu0 %71
  %vm73 = vcmask 146432
  %v74 = vsel %vm73, %v66, %v68
  %v75 = vsel %vm73, %v68, %v70
  %v76 = vsel %vm73, %v70, %v72
  %v80 = vmul.f32 %v62, %v74
  %v81 = vmul.f32 %v63, %v75
  %v82 = vmul.f32 %v64, %v76
  %v83 = vadd.f32 %v58, %v80
  %v84 = vadd.f32 %v59, %v81
  %v85 = vadd.f32 %v60, %v82
  %s86 = scalar_lea.vmem %s2, 48
  %v87 = vld [vmem:[%s86] sm:$0x3f]
  %v88 = vld [vmem:[%s86 + $0x8] sm:$0x3f]
  %v89 = vld [vmem:[%s86 + $0x10] sm:$0x3f]
  %90 = vrot.lane.b32.xlu0 %v32, 17
  %v91 = vpop.permute.xlu0 %90
  %92 = vrot.lane.b32.xlu0 %v33, 17
  %v93 = vpop.permute.xlu0 %92
  %94 = vrot.lane.b32.xlu0 %v34, 17
  %v95 = vpop.permute.xlu0 %94
  %96 = vrot.lane.b32.xlu0 %v35, 17
  %v97 = vpop.permute.xlu0 %96
  %vm98 = vcmask 138240
  %v99 = vsel %vm98, %v91, %v93
  %v100 = vsel %vm98, %v93, %v95
  %v101 = vsel %vm98, %v95, %v97
  %v105 = vmul.f32 %v87, %v99
  %v106 = vmul.f32 %v88, %v100
  %v107 = vmul.f32 %v89, %v101
  %v108 = vadd.f32 %v83, %v105
  %v109 = vadd.f32 %v84, %v106
  %v110 = vadd.f32 %v85, %v107
  %s111 = scalar_lea.vmem %s2, 72
  %v112 = vld [vmem:[%s111] sm:$0x3f]
  %v113 = vld [vmem:[%s111 + $0x8] sm:$0x3f]
  %v114 = vld [vmem:[%s111 + $0x10] sm:$0x3f]
  %115 = vrot.lane.b32.xlu0 %v32, 1
  %v116 = vpop.permute.xlu0 %115
  %117 = vrot.lane.b32.xlu0 %v33, 1
  %v118 = vpop.permute.xlu0 %117
  %119 = vrot.lane.b32.xlu0 %v34, 1
  %v120 = vpop.permute.xlu0 %119
  %121 = vrot.lane.b32.xlu0 %v35, 1
  %v122 = vpop.permute.xlu0 %121
  %vm123 = vcmask 7168
  %v124 = vsel %vm123, %v116, %v118
  %v125 = vsel %vm123, %v118, %v120
  %v126 = vsel %vm123, %v120, %v122
  %v130 = vmul.f32 %v112, %v124
  %v131 = vmul.f32 %v113, %v125
  %v132 = vmul.f32 %v114, %v126
  %v133 = vadd.f32 %v108, %v130
  %v134 = vadd.f32 %v109, %v131
  %v135 = vadd.f32 %v110, %v132
  %s136 = scalar_lea.vmem %s2, 96
  %v137 = vld [vmem:[%s136] sm:$0x3f]
  %v138 = vld [vmem:[%s136 + $0x8] sm:$0x3f]
  %v139 = vld [vmem:[%s136 + $0x10] sm:$0x3f]
  %v140 = vmul.f32 %v137, %v33
  %v141 = vmul.f32 %v138, %v34
  %v142 = vmul.f32 %v139, %v35
  %v143 = vadd.f32 %v133, %v140
  %v144 = vadd.f32 %v134, %v141
  %v145 = vadd.f32 %v135, %v142
  %s146 = scalar_lea.vmem %s2, 120
  %v147 = vld [vmem:[%s146] sm:$0x3f]
  %v148 = vld [vmem:[%s146 + $0x8] sm:$0x3f]
  %v149 = vld [vmem:[%s146 + $0x10] sm:$0x3f]
  %v150 = vld [vmem:[%s0 + $0x20] sm:$0x3f]
  %152 = vrot.lane.b32.xlu0 %v33, 127
  %v153 = vpop.permute.xlu0 %152
  %154 = vrot.lane.b32.xlu0 %v34, 127
  %v155 = vpop.permute.xlu0 %154
  %156 = vrot.lane.b32.xlu0 %v35, 127
  %v157 = vpop.permute.xlu0 %156
  %158 = vrot.lane.b32.xlu0 %v150, 127
  %v159 = vpop.permute.xlu0 %158
  %vm160 = vcmask 1039360
  %v161 = vsel %vm160, %v153, %v155
  %v162 = vsel %vm160, %v155, %v157
  %v163 = vsel %vm160, %v157, %v159
  %v167 = vmul.f32 %v147, %v161
  %v168 = vmul.f32 %v148, %v162
  %v169 = vmul.f32 %v149, %v163
  %v170 = vadd.f32 %v143, %v167
  %v171 = vadd.f32 %v144, %v168
  %v172 = vadd.f32 %v145, %v169
  %s173 = scalar_lea.vmem %s2, 144
  %v174 = vld [vmem:[%s173] sm:$0x3f]
  %v175 = vld [vmem:[%s173 + $0x8] sm:$0x3f]
  %v176 = vld [vmem:[%s173 + $0x10] sm:$0x3f]
  %177 = vrot.lane.b32.xlu0 %v33, 111
  %v178 = vpop.permute.xlu0 %177
  %179 = vrot.lane.b32.xlu0 %v34, 111
  %v180 = vpop.permute.xlu0 %179
  %181 = vrot.lane.b32.xlu0 %v35, 111
  %v182 = vpop.permute.xlu0 %181
  %183 = vrot.lane.b32.xlu0 %v150, 111
  %v184 = vpop.permute.xlu0 %183
  %vm185 = vcmask 908288
  %v186 = vsel %vm185, %v178, %v180
  %v187 = vsel %vm185, %v180, %v182
  %v188 = vsel %vm185, %v182, %v184
  %v192 = vmul.f32 %v174, %v186
  %v193 = vmul.f32 %v175, %v187
  %v194 = vmul.f32 %v176, %v188
  %v195 = vadd.f32 %v170, %v192
  %v196 = vadd.f32 %v171, %v193
  %v197 = vadd.f32 %v172, %v194
  %s198 = scalar_lea.vmem %s2, 168
  %v199 = vld [vmem:[%s198] sm:$0x3f]
  %v200 = vld [vmem:[%s198 + $0x8] sm:$0x3f]
  %v201 = vld [vmem:[%s198 + $0x10] sm:$0x3f]
  %202 = vrot.lane.b32.xlu0 %v33, 110
  %v203 = vpop.permute.xlu0 %202
  %204 = vrot.lane.b32.xlu0 %v34, 110
  %v205 = vpop.permute.xlu0 %204
  %206 = vrot.lane.b32.xlu0 %v35, 110
  %v207 = vpop.permute.xlu0 %206
  %208 = vrot.lane.b32.xlu0 %v150, 110
  %v209 = vpop.permute.xlu0 %208
  %vm210 = vcmask 900096
  %v211 = vsel %vm210, %v203, %v205
  %v212 = vsel %vm210, %v205, %v207
  %v213 = vsel %vm210, %v207, %v209
  %v217 = vmul.f32 %v199, %v211
  %v218 = vmul.f32 %v200, %v212
  %v219 = vmul.f32 %v201, %v213
  %v220 = vadd.f32 %v195, %v217
  %v221 = vadd.f32 %v196, %v218
  %v222 = vadd.f32 %v197, %v219
  %s223 = scalar_lea.vmem %s2, 192
  %v224 = vld [vmem:[%s223] sm:$0x3f]
  %v225 = vld [vmem:[%s223 + $0x8] sm:$0x3f]
  %v226 = vld [vmem:[%s223 + $0x10] sm:$0x3f]
  %227 = vrot.lane.b32.xlu0 %v33, 109
  %v228 = vpop.permute.xlu0 %227
  %229 = vrot.lane.b32.xlu0 %v34, 109
  %v230 = vpop.permute.xlu0 %229
  %231 = vrot.lane.b32.xlu0 %v35, 109
  %v232 = vpop.permute.xlu0 %231
  %233 = vrot.lane.b32.xlu0 %v150, 109
  %v234 = vpop.permute.xlu0 %233
  %vm235 = vcmask 891904
  %v236 = vsel %vm235, %v228, %v230
  %v237 = vsel %vm235, %v230, %v232
  %v238 = vsel %vm235, %v232, %v234
  %v242 = vmul.f32 %v224, %v236
  %v243 = vmul.f32 %v225, %v237
  %v244 = vmul.f32 %v226, %v238
  %v245 = vadd.f32 %v220, %v242
  %v246 = vadd.f32 %v221, %v243
  %v247 = vadd.f32 %v222, %v244
  %s248 = scalar_lea.vmem %s2, 216
  %v249 = vld [vmem:[%s248] sm:$0x3f]
  %v250 = vld [vmem:[%s248 + $0x8] sm:$0x3f]
  %v251 = vld [vmem:[%s248 + $0x10] sm:$0x3f]
  %s252 = scalar_lea.vmem %s0, 40
  %v253 = vld [vmem:[%s252] sm:$0x3f]
  %v254 = vld [vmem:[%s252 + $0x8] sm:$0x3f]
  %v255 = vld [vmem:[%s252 + $0x10] sm:$0x3f]
  %v256 = vld [vmem:[%s252 + $0x18] sm:$0x3f]
  %261 = vrot.lane.b32.xlu0 %v253, 19
  %v262 = vpop.permute.xlu0 %261
  %263 = vrot.lane.b32.xlu0 %v254, 19
  %v264 = vpop.permute.xlu0 %263
  %265 = vrot.lane.b32.xlu0 %v255, 19
  %v266 = vpop.permute.xlu0 %265
  %267 = vrot.lane.b32.xlu0 %v256, 19
  %v268 = vpop.permute.xlu0 %267
  %v269 = vsel %vm48, %v262, %v264
  %v270 = vsel %vm48, %v264, %v266
  %v271 = vsel %vm48, %v266, %v268
  %v275 = vmul.f32 %v249, %v269
  %v276 = vmul.f32 %v250, %v270
  %v277 = vmul.f32 %v251, %v271
  %v278 = vadd.f32 %v245, %v275
  %v279 = vadd.f32 %v246, %v276
  %v280 = vadd.f32 %v247, %v277
  %s281 = scalar_lea.vmem %s2, 240
  %v282 = vld [vmem:[%s281] sm:$0x3f]
  %v283 = vld [vmem:[%s281 + $0x8] sm:$0x3f]
  %v284 = vld [vmem:[%s281 + $0x10] sm:$0x3f]
  %285 = vrot.lane.b32.xlu0 %v253, 18
  %v286 = vpop.permute.xlu0 %285
  %287 = vrot.lane.b32.xlu0 %v254, 18
  %v288 = vpop.permute.xlu0 %287
  %289 = vrot.lane.b32.xlu0 %v255, 18
  %v290 = vpop.permute.xlu0 %289
  %291 = vrot.lane.b32.xlu0 %v256, 18
  %v292 = vpop.permute.xlu0 %291
  %v293 = vsel %vm73, %v286, %v288
  %v294 = vsel %vm73, %v288, %v290
  %v295 = vsel %vm73, %v290, %v292
  %v299 = vmul.f32 %v282, %v293
  %v300 = vmul.f32 %v283, %v294
  %v301 = vmul.f32 %v284, %v295
  %v302 = vadd.f32 %v278, %v299
  %v303 = vadd.f32 %v279, %v300
  %v304 = vadd.f32 %v280, %v301
  %s305 = scalar_lea.vmem %s2, 264
  %v306 = vld [vmem:[%s305] sm:$0x3f]
  %v307 = vld [vmem:[%s305 + $0x8] sm:$0x3f]
  %v308 = vld [vmem:[%s305 + $0x10] sm:$0x3f]
  %309 = vrot.lane.b32.xlu0 %v253, 17
  %v310 = vpop.permute.xlu0 %309
  %311 = vrot.lane.b32.xlu0 %v254, 17
  %v312 = vpop.permute.xlu0 %311
  %313 = vrot.lane.b32.xlu0 %v255, 17
  %v314 = vpop.permute.xlu0 %313
  %315 = vrot.lane.b32.xlu0 %v256, 17
  %v316 = vpop.permute.xlu0 %315
  %v317 = vsel %vm98, %v310, %v312
  %v318 = vsel %vm98, %v312, %v314
  %v319 = vsel %vm98, %v314, %v316
  %v323 = vmul.f32 %v306, %v317
  %v324 = vmul.f32 %v307, %v318
  %v325 = vmul.f32 %v308, %v319
  %v326 = vadd.f32 %v302, %v323
  %v327 = vadd.f32 %v303, %v324
  %v328 = vadd.f32 %v304, %v325
  %s329 = scalar_lea.vmem %s2, 288
  %v330 = vld [vmem:[%s329] sm:$0x3f]
  %v331 = vld [vmem:[%s329 + $0x8] sm:$0x3f]
  %v332 = vld [vmem:[%s329 + $0x10] sm:$0x3f]
  %333 = vrot.lane.b32.xlu0 %v253, 1
  %v334 = vpop.permute.xlu0 %333
  %335 = vrot.lane.b32.xlu0 %v254, 1
  %v336 = vpop.permute.xlu0 %335
  %337 = vrot.lane.b32.xlu0 %v255, 1
  %v338 = vpop.permute.xlu0 %337
  %339 = vrot.lane.b32.xlu0 %v256, 1
  %v340 = vpop.permute.xlu0 %339
  %v341 = vsel %vm123, %v334, %v336
  %v342 = vsel %vm123, %v336, %v338
  %v343 = vsel %vm123, %v338, %v340
  %v347 = vmul.f32 %v330, %v341
  %v348 = vmul.f32 %v331, %v342
  %v349 = vmul.f32 %v332, %v343
  %v350 = vadd.f32 %v326, %v347
  %v351 = vadd.f32 %v327, %v348
  %v352 = vadd.f32 %v328, %v349
  %s353 = scalar_lea.vmem %s2, 312
  %v354 = vld [vmem:[%s353] sm:$0x3f]
  %v355 = vld [vmem:[%s353 + $0x8] sm:$0x3f]
  %v356 = vld [vmem:[%s353 + $0x10] sm:$0x3f]
  %v357 = vmul.f32 %v354, %v254
  %v358 = vmul.f32 %v355, %v255
  %v359 = vmul.f32 %v356, %v256
  %v360 = vadd.f32 %v350, %v357
  %v361 = vadd.f32 %v351, %v358
  %v362 = vadd.f32 %v352, %v359
  %s363 = scalar_lea.vmem %s2, 336
  %v364 = vld [vmem:[%s363] sm:$0x3f]
  %v365 = vld [vmem:[%s363 + $0x8] sm:$0x3f]
  %v366 = vld [vmem:[%s363 + $0x10] sm:$0x3f]
  %v367 = vld [vmem:[%s252 + $0x20] sm:$0x3f]
  %369 = vrot.lane.b32.xlu0 %v254, 127
  %v370 = vpop.permute.xlu0 %369
  %371 = vrot.lane.b32.xlu0 %v255, 127
  %v372 = vpop.permute.xlu0 %371
  %373 = vrot.lane.b32.xlu0 %v256, 127
  %v374 = vpop.permute.xlu0 %373
  %375 = vrot.lane.b32.xlu0 %v367, 127
  %v376 = vpop.permute.xlu0 %375
  %v377 = vsel %vm160, %v370, %v372
  %v378 = vsel %vm160, %v372, %v374
  %v379 = vsel %vm160, %v374, %v376
  %v383 = vmul.f32 %v364, %v377
  %v384 = vmul.f32 %v365, %v378
  %v385 = vmul.f32 %v366, %v379
  %v386 = vadd.f32 %v360, %v383
  %v387 = vadd.f32 %v361, %v384
  %v388 = vadd.f32 %v362, %v385
  %s389 = scalar_lea.vmem %s2, 360
  %v390 = vld [vmem:[%s389] sm:$0x3f]
  %v391 = vld [vmem:[%s389 + $0x8] sm:$0x3f]
  %v392 = vld [vmem:[%s389 + $0x10] sm:$0x3f]
  %393 = vrot.lane.b32.xlu0 %v254, 111
  %v394 = vpop.permute.xlu0 %393
  %395 = vrot.lane.b32.xlu0 %v255, 111
  %v396 = vpop.permute.xlu0 %395
  %397 = vrot.lane.b32.xlu0 %v256, 111
  %v398 = vpop.permute.xlu0 %397
  %399 = vrot.lane.b32.xlu0 %v367, 111
  %v400 = vpop.permute.xlu0 %399
  %v401 = vsel %vm185, %v394, %v396
  %v402 = vsel %vm185, %v396, %v398
  %v403 = vsel %vm185, %v398, %v400
  %v407 = vmul.f32 %v390, %v401
  %v408 = vmul.f32 %v391, %v402
  %v409 = vmul.f32 %v392, %v403
  %v410 = vadd.f32 %v386, %v407
  %v411 = vadd.f32 %v387, %v408
  %v412 = vadd.f32 %v388, %v409
  %s413 = scalar_lea.vmem %s2, 384
  %v414 = vld [vmem:[%s413] sm:$0x3f]
  %v415 = vld [vmem:[%s413 + $0x8] sm:$0x3f]
  %v416 = vld [vmem:[%s413 + $0x10] sm:$0x3f]
  %417 = vrot.lane.b32.xlu0 %v254, 110
  %v418 = vpop.permute.xlu0 %417
  %419 = vrot.lane.b32.xlu0 %v255, 110
  %v420 = vpop.permute.xlu0 %419
  %421 = vrot.lane.b32.xlu0 %v256, 110
  %v422 = vpop.permute.xlu0 %421
  %423 = vrot.lane.b32.xlu0 %v367, 110
  %v424 = vpop.permute.xlu0 %423
  %v425 = vsel %vm210, %v418, %v420
  %v426 = vsel %vm210, %v420, %v422
  %v427 = vsel %vm210, %v422, %v424
  %v431 = vmul.f32 %v414, %v425
  %v432 = vmul.f32 %v415, %v426
  %v433 = vmul.f32 %v416, %v427
  %v434 = vadd.f32 %v410, %v431
  %v435 = vadd.f32 %v411, %v432
  %v436 = vadd.f32 %v412, %v433
  %s437 = scalar_lea.vmem %s2, 408
  %v438 = vld [vmem:[%s437] sm:$0x3f]
  %v439 = vld [vmem:[%s437 + $0x8] sm:$0x3f]
  %v440 = vld [vmem:[%s437 + $0x10] sm:$0x3f]
  %441 = vrot.lane.b32.xlu0 %v254, 109
  %v442 = vpop.permute.xlu0 %441
  %443 = vrot.lane.b32.xlu0 %v255, 109
  %v444 = vpop.permute.xlu0 %443
  %445 = vrot.lane.b32.xlu0 %v256, 109
  %v446 = vpop.permute.xlu0 %445
  %447 = vrot.lane.b32.xlu0 %v367, 109
  %v448 = vpop.permute.xlu0 %447
  %v449 = vsel %vm235, %v442, %v444
  %v450 = vsel %vm235, %v444, %v446
  %v451 = vsel %vm235, %v446, %v448
  %v455 = vmul.f32 %v438, %v449
  %v456 = vmul.f32 %v439, %v450
  %v457 = vmul.f32 %v440, %v451
  %v458 = vadd.f32 %v434, %v455
  %v459 = vadd.f32 %v435, %v456
  %v460 = vadd.f32 %v436, %v457
  %s461 = scalar_lea.vmem %s2, 432
  %v462 = vld [vmem:[%s461] sm:$0x3f]
  %v463 = vld [vmem:[%s461 + $0x8] sm:$0x3f]
  %v464 = vld [vmem:[%s461 + $0x10] sm:$0x3f]
  %s465 = scalar_lea.vmem %s0, 80
  %v466 = vld [vmem:[%s465] sm:$0x3f]
  %v467 = vld [vmem:[%s465 + $0x8] sm:$0x3f]
  %v468 = vld [vmem:[%s465 + $0x10] sm:$0x3f]
  %v469 = vld [vmem:[%s465 + $0x18] sm:$0x3f]
  %474 = vrot.lane.b32.xlu0 %v466, 19
  %v475 = vpop.permute.xlu0 %474
  %476 = vrot.lane.b32.xlu0 %v467, 19
  %v477 = vpop.permute.xlu0 %476
  %478 = vrot.lane.b32.xlu0 %v468, 19
  %v479 = vpop.permute.xlu0 %478
  %480 = vrot.lane.b32.xlu0 %v469, 19
  %v481 = vpop.permute.xlu0 %480
  %v482 = vsel %vm48, %v475, %v477
  %v483 = vsel %vm48, %v477, %v479
  %v484 = vsel %vm48, %v479, %v481
  %v488 = vmul.f32 %v462, %v482
  %v489 = vmul.f32 %v463, %v483
  %v490 = vmul.f32 %v464, %v484
  %v491 = vadd.f32 %v458, %v488
  %v492 = vadd.f32 %v459, %v489
  %v493 = vadd.f32 %v460, %v490
  %s494 = scalar_lea.vmem %s2, 456
  %v495 = vld [vmem:[%s494] sm:$0x3f]
  %v496 = vld [vmem:[%s494 + $0x8] sm:$0x3f]
  %v497 = vld [vmem:[%s494 + $0x10] sm:$0x3f]
  %498 = vrot.lane.b32.xlu0 %v466, 18
  %v499 = vpop.permute.xlu0 %498
  %500 = vrot.lane.b32.xlu0 %v467, 18
  %v501 = vpop.permute.xlu0 %500
  %502 = vrot.lane.b32.xlu0 %v468, 18
  %v503 = vpop.permute.xlu0 %502
  %504 = vrot.lane.b32.xlu0 %v469, 18
  %v505 = vpop.permute.xlu0 %504
  %v506 = vsel %vm73, %v499, %v501
  %v507 = vsel %vm73, %v501, %v503
  %v508 = vsel %vm73, %v503, %v505
  %v512 = vmul.f32 %v495, %v506
  %v513 = vmul.f32 %v496, %v507
  %v514 = vmul.f32 %v497, %v508
  %v515 = vadd.f32 %v491, %v512
  %v516 = vadd.f32 %v492, %v513
  %v517 = vadd.f32 %v493, %v514
  %s518 = scalar_lea.vmem %s2, 480
  %v519 = vld [vmem:[%s518] sm:$0x3f]
  %v520 = vld [vmem:[%s518 + $0x8] sm:$0x3f]
  %v521 = vld [vmem:[%s518 + $0x10] sm:$0x3f]
  %522 = vrot.lane.b32.xlu0 %v466, 17
  %v523 = vpop.permute.xlu0 %522
  %524 = vrot.lane.b32.xlu0 %v467, 17
  %v525 = vpop.permute.xlu0 %524
  %526 = vrot.lane.b32.xlu0 %v468, 17
  %v527 = vpop.permute.xlu0 %526
  %528 = vrot.lane.b32.xlu0 %v469, 17
  %v529 = vpop.permute.xlu0 %528
  %v530 = vsel %vm98, %v523, %v525
  %v531 = vsel %vm98, %v525, %v527
  %v532 = vsel %vm98, %v527, %v529
  %v536 = vmul.f32 %v519, %v530
  %v537 = vmul.f32 %v520, %v531
  %v538 = vmul.f32 %v521, %v532
  %v539 = vadd.f32 %v515, %v536
  %v540 = vadd.f32 %v516, %v537
  %v541 = vadd.f32 %v517, %v538
  %s542 = scalar_lea.vmem %s2, 504
  %v543 = vld [vmem:[%s542] sm:$0x3f]
  %v544 = vld [vmem:[%s542 + $0x8] sm:$0x3f]
  %v545 = vld [vmem:[%s542 + $0x10] sm:$0x3f]
  %546 = vrot.lane.b32.xlu0 %v466, 1
  %v547 = vpop.permute.xlu0 %546
  %548 = vrot.lane.b32.xlu0 %v467, 1
  %v549 = vpop.permute.xlu0 %548
  %550 = vrot.lane.b32.xlu0 %v468, 1
  %v551 = vpop.permute.xlu0 %550
  %552 = vrot.lane.b32.xlu0 %v469, 1
  %v553 = vpop.permute.xlu0 %552
  %v554 = vsel %vm123, %v547, %v549
  %v555 = vsel %vm123, %v549, %v551
  %v556 = vsel %vm123, %v551, %v553
  %v560 = vmul.f32 %v543, %v554
  %v561 = vmul.f32 %v544, %v555
  %v562 = vmul.f32 %v545, %v556
  %v563 = vadd.f32 %v539, %v560
  %v564 = vadd.f32 %v540, %v561
  %v565 = vadd.f32 %v541, %v562
  %s566 = scalar_lea.vmem %s2, 528
  %v567 = vld [vmem:[%s566] sm:$0x3f]
  %v568 = vld [vmem:[%s566 + $0x8] sm:$0x3f]
  %v569 = vld [vmem:[%s566 + $0x10] sm:$0x3f]
  %v570 = vmul.f32 %v567, %v467
  %v571 = vmul.f32 %v568, %v468
  %v572 = vmul.f32 %v569, %v469
  %v573 = vadd.f32 %v563, %v570
  %v574 = vadd.f32 %v564, %v571
  %v575 = vadd.f32 %v565, %v572
  %s576 = scalar_lea.vmem %s2, 552
  %v577 = vld [vmem:[%s576] sm:$0x3f]
  %v578 = vld [vmem:[%s576 + $0x8] sm:$0x3f]
  %v579 = vld [vmem:[%s576 + $0x10] sm:$0x3f]
  %v580 = vld [vmem:[%s465 + $0x20] sm:$0x3f]
  %582 = vrot.lane.b32.xlu0 %v467, 127
  %v583 = vpop.permute.xlu0 %582
  %584 = vrot.lane.b32.xlu0 %v468, 127
  %v585 = vpop.permute.xlu0 %584
  %586 = vrot.lane.b32.xlu0 %v469, 127
  %v587 = vpop.permute.xlu0 %586
  %588 = vrot.lane.b32.xlu0 %v580, 127
  %v589 = vpop.permute.xlu0 %588
  %v590 = vsel %vm160, %v583, %v585
  %v591 = vsel %vm160, %v585, %v587
  %v592 = vsel %vm160, %v587, %v589
  %v596 = vmul.f32 %v577, %v590
  %v597 = vmul.f32 %v578, %v591
  %v598 = vmul.f32 %v579, %v592
  %v599 = vadd.f32 %v573, %v596
  %v600 = vadd.f32 %v574, %v597
  %v601 = vadd.f32 %v575, %v598
  %s602 = scalar_lea.vmem %s2, 576
  %v603 = vld [vmem:[%s602] sm:$0x3f]
  %v604 = vld [vmem:[%s602 + $0x8] sm:$0x3f]
  %v605 = vld [vmem:[%s602 + $0x10] sm:$0x3f]
  %606 = vrot.lane.b32.xlu0 %v467, 111
  %v607 = vpop.permute.xlu0 %606
  %608 = vrot.lane.b32.xlu0 %v468, 111
  %v609 = vpop.permute.xlu0 %608
  %610 = vrot.lane.b32.xlu0 %v469, 111
  %v611 = vpop.permute.xlu0 %610
  %612 = vrot.lane.b32.xlu0 %v580, 111
  %v613 = vpop.permute.xlu0 %612
  %v614 = vsel %vm185, %v607, %v609
  %v615 = vsel %vm185, %v609, %v611
  %v616 = vsel %vm185, %v611, %v613
  %v620 = vmul.f32 %v603, %v614
  %v621 = vmul.f32 %v604, %v615
  %v622 = vmul.f32 %v605, %v616
  %v623 = vadd.f32 %v599, %v620
  %v624 = vadd.f32 %v600, %v621
  %v625 = vadd.f32 %v601, %v622
  %s626 = scalar_lea.vmem %s2, 600
  %v627 = vld [vmem:[%s626] sm:$0x3f]
  %v628 = vld [vmem:[%s626 + $0x8] sm:$0x3f]
  %v629 = vld [vmem:[%s626 + $0x10] sm:$0x3f]
  %630 = vrot.lane.b32.xlu0 %v467, 110
  %v631 = vpop.permute.xlu0 %630
  %632 = vrot.lane.b32.xlu0 %v468, 110
  %v633 = vpop.permute.xlu0 %632
  %634 = vrot.lane.b32.xlu0 %v469, 110
  %v635 = vpop.permute.xlu0 %634
  %636 = vrot.lane.b32.xlu0 %v580, 110
  %v637 = vpop.permute.xlu0 %636
  %v638 = vsel %vm210, %v631, %v633
  %v639 = vsel %vm210, %v633, %v635
  %v640 = vsel %vm210, %v635, %v637
  %v644 = vmul.f32 %v627, %v638
  %v645 = vmul.f32 %v628, %v639
  %v646 = vmul.f32 %v629, %v640
  %v647 = vadd.f32 %v623, %v644
  %v648 = vadd.f32 %v624, %v645
  %v649 = vadd.f32 %v625, %v646
  %s650 = scalar_lea.vmem %s2, 624
  %v651 = vld [vmem:[%s650] sm:$0x3f]
  %v652 = vld [vmem:[%s650 + $0x8] sm:$0x3f]
  %v653 = vld [vmem:[%s650 + $0x10] sm:$0x3f]
  %654 = vrot.lane.b32.xlu0 %v467, 109
  %v655 = vpop.permute.xlu0 %654
  %656 = vrot.lane.b32.xlu0 %v468, 109
  %v657 = vpop.permute.xlu0 %656
  %658 = vrot.lane.b32.xlu0 %v469, 109
  %v659 = vpop.permute.xlu0 %658
  %660 = vrot.lane.b32.xlu0 %v580, 109
  %v661 = vpop.permute.xlu0 %660
  %v662 = vsel %vm235, %v655, %v657
  %v663 = vsel %vm235, %v657, %v659
  %v664 = vsel %vm235, %v659, %v661
  %v668 = vmul.f32 %v651, %v662
  %v669 = vmul.f32 %v652, %v663
  %v670 = vmul.f32 %v653, %v664
  %v671 = vadd.f32 %v647, %v668
  %v672 = vadd.f32 %v648, %v669
  %v673 = vadd.f32 %v649, %v670
  %v674 = vmax.f32 %v671, 0.0
  %v675 = vmax.f32 %v672, 0.0
  %v676 = vmax.f32 %v673, 0.0
  %v677 = vld [vmem:[%s6] sm:$0x3f]
  %v678 = vld [vmem:[%s6 + $0x8] sm:$0x3f]
  %v679 = vld [vmem:[%s6 + $0x10] sm:$0x3f]
  %v680 = vmul.f32 %v674, %v677
  %v681 = vmul.f32 %v675, %v678
  %v682 = vmul.f32 %v676, %v679
  %683 = vst [vmem:[#allocation2] sm:$0x3f] 0.0
  %684 = vst [vmem:[#allocation2 + $0x8] sm:$0x3f] 0.0
  %685 = vst [vmem:[#allocation2 + $0x10] sm:$0x3f] 0.0
  %686 = vst [vmem:[#allocation2 + $0x18] sm:$0x3f] 0.0
  %687 = vst [vmem:[#allocation2 + $0x20] sm:$0x3f] 0.0
  %688 = vst [vmem:[#allocation2 + $0x28] sm:$0x3f] 0.0
  %689 = vst [vmem:[#allocation2 + $0x30] sm:$0x3f] 0.0
  %690 = vst [vmem:[#allocation2 + $0x38] sm:$0x3f] 0.0
  %691 = vst [vmem:[#allocation2 + $0x40] sm:$0x3f] 0.0
  %692 = vst [vmem:[#allocation2 + $0x48] sm:$0x3f] 0.0
  %693 = vst [vmem:[#allocation2 + $0x50] sm:$0x3f] 0.0
  %694 = vst [vmem:[#allocation2 + $0x58] sm:$0x3f] 0.0
  %695 = vst [vmem:[#allocation2 + $0x60] sm:$0x3f] 0.0
  %696 = vst [vmem:[#allocation2 + $0x68] sm:$0x3f] 0.0
  %697 = vst [vmem:[#allocation2 + $0x70] sm:$0x3f] 0.0
  %v701 = vrot.slane %v680, 6
  %v702 = vrot.slane %v681, 6
  %v703 = vrot.slane %v682, 6
  %v707 = vrot.slane %v680, 4
  %v708 = vrot.slane %v681, 4
  %v709 = vrot.slane %v682, 4
  %vm713 = vcmask 1041408
  %v714 = vsel %vm713, %v680, %v701
  %v715 = vsel %vm713, %v681, %v702
  %v716 = vsel %vm713, %v682, %v703
  %vm717 = vcmask 1043456
  %v718 = vsel %vm717, %v714, %v707
  %v719 = vsel %vm717, %v715, %v708
  %v720 = vsel %vm717, %v716, %v709
  %721 = vst [vmem:[#allocation2 + $0x8] sm:$0x3f] %v718
  %722 = vst [vmem:[#allocation2 + $0x10] sm:$0x3f] %v719
  %723 = vst [vmem:[#allocation2 + $0x18] sm:$0x3f] %v720
  %v724 = vrot.slane %v680, 2
  %v725 = vrot.slane %v681, 2
  %v726 = vrot.slane %v682, 2
  %v730 = vsel %vm713, %v724, %v680
  %v731 = vsel %vm713, %v725, %v681
  %v732 = vsel %vm713, %v726, %v682
  %v733 = vsel %vm717, %v730, %v701
  %v734 = vsel %vm717, %v731, %v702
  %v735 = vsel %vm717, %v732, %v703
  %s736 = scalar_lea.vmem [#allocation2], 40
  %737 = vst [vmem:[%s736 + $0x8] sm:$0x3f] %v733
  %738 = vst [vmem:[%s736 + $0x10] sm:$0x3f] %v734
  %739 = vst [vmem:[%s736 + $0x18] sm:$0x3f] %v735
  %v740 = vsel %vm713, %v707, %v724
  %v741 = vsel %vm713, %v708, %v725
  %v742 = vsel %vm713, %v709, %v726
  %v743 = vsel %vm717, %v740, %v680
  %v744 = vsel %vm717, %v741, %v681
  %v745 = vsel %vm717, %v742, %v682
  %s746 = scalar_lea.vmem [#allocation2], 80
  %747 = vst [vmem:[%s746 + $0x8] sm:$0x3f] %v743
  %748 = vst [vmem:[%s746 + $0x10] sm:$0x3f] %v744
  %749 = vst [vmem:[%s746 + $0x18] sm:$0x3f] %v745
  %v750 = vld [vmem:[%s5] sm:$0x3f]
  %v751 = vld [vmem:[%s5 + $0x8] sm:$0x3f]
  %v752 = vld [vmem:[%s5 + $0x10] sm:$0x3f]
  %v753 = vld [vmem:[%s4] sm:$0x3f]
  %v754 = vld [vmem:[%s4 + $0x8] sm:$0x3f]
  %v755 = vld [vmem:[%s4 + $0x10] sm:$0x3f]
  %v756 = vld [vmem:[#allocation2] sm:$0x3f]
  %v757 = vld [vmem:[#allocation2 + $0x8] sm:$0x3f]
  %v758 = vld [vmem:[#allocation2 + $0x10] sm:$0x3f]
  %v759 = vld [vmem:[#allocation2 + $0x18] sm:$0x3f]
  %764 = vrot.lane.b32.xlu0 %v756, 19
  %v765 = vpop.permute.xlu0 %764
  %766 = vrot.lane.b32.xlu0 %v757, 19
  %v767 = vpop.permute.xlu0 %766
  %768 = vrot.lane.b32.xlu0 %v758, 19
  %v769 = vpop.permute.xlu0 %768
  %770 = vrot.lane.b32.xlu0 %v759, 19
  %v771 = vpop.permute.xlu0 %770
  %v772 = vsel %vm48, %v765, %v767
  %v773 = vsel %vm48, %v767, %v769
  %v774 = vsel %vm48, %v769, %v771
  %v778 = vmul.f32 %v753, %v772
  %v779 = vmul.f32 %v754, %v773
  %v780 = vmul.f32 %v755, %v774
  %v781 = vadd.f32 %v750, %v778
  %v782 = vadd.f32 %v751, %v779
  %v783 = vadd.f32 %v752, %v780
  %s784 = scalar_lea.vmem %s4, 24
  %v785 = vld [vmem:[%s784] sm:$0x3f]
  %v786 = vld [vmem:[%s784 + $0x8] sm:$0x3f]
  %v787 = vld [vmem:[%s784 + $0x10] sm:$0x3f]
  %788 = vrot.lane.b32.xlu0 %v756, 18
  %v789 = vpop.permute.xlu0 %788
  %790 = vrot.lane.b32.xlu0 %v757, 18
  %v791 = vpop.permute.xlu0 %790
  %792 = vrot.lane.b32.xlu0 %v758, 18
  %v793 = vpop.permute.xlu0 %792
  %794 = vrot.lane.b32.xlu0 %v759, 18
  %v795 = vpop.permute.xlu0 %794
  %v796 = vsel %vm73, %v789, %v791
  %v797 = vsel %vm73, %v791, %v793
  %v798 = vsel %vm73, %v793, %v795
  %v802 = vmul.f32 %v785, %v796
  %v803 = vmul.f32 %v786, %v797
  %v804 = vmul.f32 %v787, %v798
  %v805 = vadd.f32 %v781, %v802
  %v806 = vadd.f32 %v782, %v803
  %v807 = vadd.f32 %v783, %v804
  %s808 = scalar_lea.vmem %s4, 48
  %v809 = vld [vmem:[%s808] sm:$0x3f]
  %v810 = vld [vmem:[%s808 + $0x8] sm:$0x3f]
  %v811 = vld [vmem:[%s808 + $0x10] sm:$0x3f]
  %812 = vrot.lane.b32.xlu0 %v756, 17
  %v813 = vpop.permute.xlu0 %812
  %814 = vrot.lane.b32.xlu0 %v757, 17
  %v815 = vpop.permute.xlu0 %814
  %816 = vrot.lane.b32.xlu0 %v758, 17
  %v817 = vpop.permute.xlu0 %816
  %818 = vrot.lane.b32.xlu0 %v759, 17
  %v819 = vpop.permute.xlu0 %818
  %v820 = vsel %vm98, %v813, %v815
  %v821 = vsel %vm98, %v815, %v817
  %v822 = vsel %vm98, %v817, %v819
  %v826 = vmul.f32 %v809, %v820
  %v827 = vmul.f32 %v810, %v821
  %v828 = vmul.f32 %v811, %v822
  %v829 = vadd.f32 %v805, %v826
  %v830 = vadd.f32 %v806, %v827
  %v831 = vadd.f32 %v807, %v828
  %s832 = scalar_lea.vmem %s4, 72
  %v833 = vld [vmem:[%s832] sm:$0x3f]
  %v834 = vld [vmem:[%s832 + $0x8] sm:$0x3f]
  %v835 = vld [vmem:[%s832 + $0x10] sm:$0x3f]
  %836 = vrot.lane.b32.xlu0 %v756, 1
  %v837 = vpop.permute.xlu0 %836
  %838 = vrot.lane.b32.xlu0 %v757, 1
  %v839 = vpop.permute.xlu0 %838
  %840 = vrot.lane.b32.xlu0 %v758, 1
  %v841 = vpop.permute.xlu0 %840
  %842 = vrot.lane.b32.xlu0 %v759, 1
  %v843 = vpop.permute.xlu0 %842
  %v844 = vsel %vm123, %v837, %v839
  %v845 = vsel %vm123, %v839, %v841
  %v846 = vsel %vm123, %v841, %v843
  %v850 = vmul.f32 %v833, %v844
  %v851 = vmul.f32 %v834, %v845
  %v852 = vmul.f32 %v835, %v846
  %v853 = vadd.f32 %v829, %v850
  %v854 = vadd.f32 %v830, %v851
  %v855 = vadd.f32 %v831, %v852
  %s856 = scalar_lea.vmem %s4, 96
  %v857 = vld [vmem:[%s856] sm:$0x3f]
  %v858 = vld [vmem:[%s856 + $0x8] sm:$0x3f]
  %v859 = vld [vmem:[%s856 + $0x10] sm:$0x3f]
  %v860 = vmul.f32 %v857, %v757
  %v861 = vmul.f32 %v858, %v758
  %v862 = vmul.f32 %v859, %v759
  %v863 = vadd.f32 %v853, %v860
  %v864 = vadd.f32 %v854, %v861
  %v865 = vadd.f32 %v855, %v862
  %s866 = scalar_lea.vmem %s4, 120
  %v867 = vld [vmem:[%s866] sm:$0x3f]
  %v868 = vld [vmem:[%s866 + $0x8] sm:$0x3f]
  %v869 = vld [vmem:[%s866 + $0x10] sm:$0x3f]
  %v870 = vld [vmem:[#allocation2 + $0x20] sm:$0x3f]
  %872 = vrot.lane.b32.xlu0 %v757, 127
  %v873 = vpop.permute.xlu0 %872
  %874 = vrot.lane.b32.xlu0 %v758, 127
  %v875 = vpop.permute.xlu0 %874
  %876 = vrot.lane.b32.xlu0 %v759, 127
  %v877 = vpop.permute.xlu0 %876
  %878 = vrot.lane.b32.xlu0 %v870, 127
  %v879 = vpop.permute.xlu0 %878
  %v880 = vsel %vm160, %v873, %v875
  %v881 = vsel %vm160, %v875, %v877
  %v882 = vsel %vm160, %v877, %v879
  %v886 = vmul.f32 %v867, %v880
  %v887 = vmul.f32 %v868, %v881
  %v888 = vmul.f32 %v869, %v882
  %v889 = vadd.f32 %v863, %v886
  %v890 = vadd.f32 %v864, %v887
  %v891 = vadd.f32 %v865, %v888
  %s892 = scalar_lea.vmem %s4, 144
  %v893 = vld [vmem:[%s892] sm:$0x3f]
  %v894 = vld [vmem:[%s892 + $0x8] sm:$0x3f]
  %v895 = vld [vmem:[%s892 + $0x10] sm:$0x3f]
  %896 = vrot.lane.b32.xlu0 %v757, 111
  %v897 = vpop.permute.xlu0 %896
  %898 = vrot.lane.b32.xlu0 %v758, 111
  %v899 = vpop.permute.xlu0 %898
  %900 = vrot.lane.b32.xlu0 %v759, 111
  %v901 = vpop.permute.xlu0 %900
  %902 = vrot.lane.b32.xlu0 %v870, 111
  %v903 = vpop.permute.xlu0 %902
  %v904 = vsel %vm185, %v897, %v899
  %v905 = vsel %vm185, %v899, %v901
  %v906 = vsel %vm185, %v901, %v903
  %v910 = vmul.f32 %v893, %v904
  %v911 = vmul.f32 %v894, %v905
  %v912 = vmul.f32 %v895, %v906
  %v913 = vadd.f32 %v889, %v910
  %v914 = vadd.f32 %v890, %v911
  %v915 = vadd.f32 %v891, %v912
  %s916 = scalar_lea.vmem %s4, 168
  %v917 = vld [vmem:[%s916] sm:$0x3f]
  %v918 = vld [vmem:[%s916 + $0x8] sm:$0x3f]
  %v919 = vld [vmem:[%s916 + $0x10] sm:$0x3f]
  %920 = vrot.lane.b32.xlu0 %v757, 110
  %v921 = vpop.permute.xlu0 %920
  %922 = vrot.lane.b32.xlu0 %v758, 110
  %v923 = vpop.permute.xlu0 %922
  %924 = vrot.lane.b32.xlu0 %v759, 110
  %v925 = vpop.permute.xlu0 %924
  %926 = vrot.lane.b32.xlu0 %v870, 110
  %v927 = vpop.permute.xlu0 %926
  %v928 = vsel %vm210, %v921, %v923
  %v929 = vsel %vm210, %v923, %v925
  %v930 = vsel %vm210, %v925, %v927
  %v934 = vmul.f32 %v917, %v928
  %v935 = vmul.f32 %v918, %v929
  %v936 = vmul.f32 %v919, %v930
  %v937 = vadd.f32 %v913, %v934
  %v938 = vadd.f32 %v914, %v935
  %v939 = vadd.f32 %v915, %v936
  %s940 = scalar_lea.vmem %s4, 192
  %v941 = vld [vmem:[%s940] sm:$0x3f]
  %v942 = vld [vmem:[%s940 + $0x8] sm:$0x3f]
  %v943 = vld [vmem:[%s940 + $0x10] sm:$0x3f]
  %944 = vrot.lane.b32.xlu0 %v757, 109
  %v945 = vpop.permute.xlu0 %944
  %946 = vrot.lane.b32.xlu0 %v758, 109
  %v947 = vpop.permute.xlu0 %946
  %948 = vrot.lane.b32.xlu0 %v759, 109
  %v949 = vpop.permute.xlu0 %948
  %950 = vrot.lane.b32.xlu0 %v870, 109
  %v951 = vpop.permute.xlu0 %950
  %v952 = vsel %vm235, %v945, %v947
  %v953 = vsel %vm235, %v947, %v949
  %v954 = vsel %vm235, %v949, %v951
  %v958 = vmul.f32 %v941, %v952
  %v959 = vmul.f32 %v942, %v953
  %v960 = vmul.f32 %v943, %v954
  %v961 = vadd.f32 %v937, %v958
  %v962 = vadd.f32 %v938, %v959
  %v963 = vadd.f32 %v939, %v960
  %s964 = scalar_lea.vmem %s4, 216
  %v965 = vld [vmem:[%s964] sm:$0x3f]
  %v966 = vld [vmem:[%s964 + $0x8] sm:$0x3f]
  %v967 = vld [vmem:[%s964 + $0x10] sm:$0x3f]
  %v968 = vld [vmem:[%s736] sm:$0x3f]
  %v969 = vld [vmem:[%s736 + $0x8] sm:$0x3f]
  %v970 = vld [vmem:[%s736 + $0x10] sm:$0x3f]
  %v971 = vld [vmem:[%s736 + $0x18] sm:$0x3f]
  %976 = vrot.lane.b32.xlu0 %v968, 19
  %v977 = vpop.permute.xlu0 %976
  %978 = vrot.lane.b32.xlu0 %v969, 19
  %v979 = vpop.permute.xlu0 %978
  %980 = vrot.lane.b32.xlu0 %v970, 19
  %v981 = vpop.permute.xlu0 %980
  %982 = vrot.lane.b32.xlu0 %v971, 19
  %v983 = vpop.permute.xlu0 %982
  %v984 = vsel %vm48, %v977, %v979
  %v985 = vsel %vm48, %v979, %v981
  %v986 = vsel %vm48, %v981, %v983
  %v990 = vmul.f32 %v965, %v984
  %v991 = vmul.f32 %v966, %v985
  %v992 = vmul.f32 %v967, %v986
  %v993 = vadd.f32 %v961, %v990
  %v994 = vadd.f32 %v962, %v991
  %v995 = vadd.f32 %v963, %v992
  %s996 = scalar_lea.vmem %s4, 240
  %v997 = vld [vmem:[%s996] sm:$0x3f]
  %v998 = vld [vmem:[%s996 + $0x8] sm:$0x3f]
  %v999 = vld [vmem:[%s996 + $0x10] sm:$0x3f]
  %1000 = vrot.lane.b32.xlu0 %v968, 18
  %v1001 = vpop.permute.xlu0 %1000
  %1002 = vrot.lane.b32.xlu0 %v969, 18
  %v1003 = vpop.permute.xlu0 %1002
  %1004 = vrot.lane.b32.xlu0 %v970, 18
  %v1005 = vpop.permute.xlu0 %1004
  %1006 = vrot.lane.b32.xlu0 %v971, 18
  %v1007 = vpop.permute.xlu0 %1006
  %v1008 = vsel %vm73, %v1001, %v1003
  %v1009 = vsel %vm73, %v1003, %v1005
  %v1010 = vsel %vm73, %v1005, %v1007
  %v1014 = vmul.f32 %v997, %v1008
  %v1015 = vmul.f32 %v998, %v1009
  %v1016 = vmul.f32 %v999, %v1010
  %v1017 = vadd.f32 %v993, %v1014
  %v1018 = vadd.f32 %v994, %v1015
  %v1019 = vadd.f32 %v995, %v1016
  %s1020 = scalar_lea.vmem %s4, 264
  %v1021 = vld [vmem:[%s1020] sm:$0x3f]
  %v1022 = vld [vmem:[%s1020 + $0x8] sm:$0x3f]
  %v1023 = vld [vmem:[%s1020 + $0x10] sm:$0x3f]
  %1024 = vrot.lane.b32.xlu0 %v968, 17
  %v1025 = vpop.permute.xlu0 %1024
  %1026 = vrot.lane.b32.xlu0 %v969, 17
  %v1027 = vpop.permute.xlu0 %1026
  %1028 = vrot.lane.b32.xlu0 %v970, 17
  %v1029 = vpop.permute.xlu0 %1028
  %1030 = vrot.lane.b32.xlu0 %v971, 17
  %v1031 = vpop.permute.xlu0 %1030
  %v1032 = vsel %vm98, %v1025, %v1027
  %v1033 = vsel %vm98, %v1027, %v1029
  %v1034 = vsel %vm98, %v1029, %v1031
  %v1038 = vmul.f32 %v1021, %v1032
  %v1039 = vmul.f32 %v1022, %v1033
  %v1040 = vmul.f32 %v1023, %v1034
  %v1041 = vadd.f32 %v1017, %v1038
  %v1042 = vadd.f32 %v1018, %v1039
  %v1043 = vadd.f32 %v1019, %v1040
  %s1044 = scalar_lea.vmem %s4, 288
  %v1045 = vld [vmem:[%s1044] sm:$0x3f]
  %v1046 = vld [vmem:[%s1044 + $0x8] sm:$0x3f]
  %v1047 = vld [vmem:[%s1044 + $0x10] sm:$0x3f]
  %1048 = vrot.lane.b32.xlu0 %v968, 1
  %v1049 = vpop.permute.xlu0 %1048
  %1050 = vrot.lane.b32.xlu0 %v969, 1
  %v1051 = vpop.permute.xlu0 %1050
  %1052 = vrot.lane.b32.xlu0 %v970, 1
  %v1053 = vpop.permute.xlu0 %1052
  %1054 = vrot.lane.b32.xlu0 %v971, 1
  %v1055 = vpop.permute.xlu0 %1054
  %v1056 = vsel %vm123, %v1049, %v1051
  %v1057 = vsel %vm123, %v1051, %v1053
  %v1058 = vsel %vm123, %v1053, %v1055
  %v1062 = vmul.f32 %v1045, %v1056
  %v1063 = vmul.f32 %v1046, %v1057
  %v1064 = vmul.f32 %v1047, %v1058
  %v1065 = vadd.f32 %v1041, %v1062
  %v1066 = vadd.f32 %v1042, %v1063
  %v1067 = vadd.f32 %v1043, %v1064
  %s1068 = scalar_lea.vmem %s4, 312
  %v1069 = vld [vmem:[%s1068] sm:$0x3f]
  %v1070 = vld [vmem:[%s1068 + $0x8] sm:$0x3f]
  %v1071 = vld [vmem:[%s1068 + $0x10] sm:$0x3f]
  %v1072 = vmul.f32 %v1069, %v969
  %v1073 = vmul.f32 %v1070, %v970
  %v1074 = vmul.f32 %v1071, %v971
  %v1075 = vadd.f32 %v1065, %v1072
  %v1076 = vadd.f32 %v1066, %v1073
  %v1077 = vadd.f32 %v1067, %v1074
  %s1078 = scalar_lea.vmem %s4, 336
  %v1079 = vld [vmem:[%s1078] sm:$0x3f]
  %v1080 = vld [vmem:[%s1078 + $0x8] sm:$0x3f]
  %v1081 = vld [vmem:[%s1078 + $0x10] sm:$0x3f]
  %v1082 = vld [vmem:[%s736 + $0x20] sm:$0x3f]
  %1084 = vrot.lane.b32.xlu0 %v969, 127
  %v1085 = vpop.permute.xlu0 %1084
  %1086 = vrot.lane.b32.xlu0 %v970, 127
  %v1087 = vpop.permute.xlu0 %1086
  %1088 = vrot.lane.b32.xlu0 %v971, 127
  %v1089 = vpop.permute.xlu0 %1088
  %1090 = vrot.lane.b32.xlu0 %v1082, 127
  %v1091 = vpop.permute.xlu0 %1090
  %v1092 = vsel %vm160, %v1085, %v1087
  %v1093 = vsel %vm160, %v1087, %v1089
  %v1094 = vsel %vm160, %v1089, %v1091
  %v1098 = vmul.f32 %v1079, %v1092
  %v1099 = vmul.f32 %v1080, %v1093
  %v1100 = vmul.f32 %v1081, %v1094
  %v1101 = vadd.f32 %v1075, %v1098
  %v1102 = vadd.f32 %v1076, %v1099
  %v1103 = vadd.f32 %v1077, %v1100
  %s1104 = scalar_lea.vmem %s4, 360
  %v1105 = vld [vmem:[%s1104] sm:$0x3f]
  %v1106 = vld [vmem:[%s1104 + $0x8] sm:$0x3f]
  %v1107 = vld [vmem:[%s1104 + $0x10] sm:$0x3f]
  %1108 = vrot.lane.b32.xlu0 %v969, 111
  %v1109 = vpop.permute.xlu0 %1108
  %1110 = vrot.lane.b32.xlu0 %v970, 111
  %v1111 = vpop.permute.xlu0 %1110
  %1112 = vrot.lane.b32.xlu0 %v971, 111
  %v1113 = vpop.permute.xlu0 %1112
  %1114 = vrot.lane.b32.xlu0 %v1082, 111
  %v1115 = vpop.permute.xlu0 %1114
  %v1116 = vsel %vm185, %v1109, %v1111
  %v1117 = vsel %vm185, %v1111, %v1113
  %v1118 = vsel %vm185, %v1113, %v1115
  %v1122 = vmul.f32 %v1105, %v1116
  %v1123 = vmul.f32 %v1106, %v1117
  %v1124 = vmul.f32 %v1107, %v1118
  %v1125 = vadd.f32 %v1101, %v1122
  %v1126 = vadd.f32 %v1102, %v1123
  %v1127 = vadd.f32 %v1103, %v1124
  %s1128 = scalar_lea.vmem %s4, 384
  %v1129 = vld [vmem:[%s1128] sm:$0x3f]
  %v1130 = vld [vmem:[%s1128 + $0x8] sm:$0x3f]
  %v1131 = vld [vmem:[%s1128 + $0x10] sm:$0x3f]
  %1132 = vrot.lane.b32.xlu0 %v969, 110
  %v1133 = vpop.permute.xlu0 %1132
  %1134 = vrot.lane.b32.xlu0 %v970, 110
  %v1135 = vpop.permute.xlu0 %1134
  %1136 = vrot.lane.b32.xlu0 %v971, 110
  %v1137 = vpop.permute.xlu0 %1136
  %1138 = vrot.lane.b32.xlu0 %v1082, 110
  %v1139 = vpop.permute.xlu0 %1138
  %v1140 = vsel %vm210, %v1133, %v1135
  %v1141 = vsel %vm210, %v1135, %v1137
  %v1142 = vsel %vm210, %v1137, %v1139
  %v1146 = vmul.f32 %v1129, %v1140
  %v1147 = vmul.f32 %v1130, %v1141
  %v1148 = vmul.f32 %v1131, %v1142
  %v1149 = vadd.f32 %v1125, %v1146
  %v1150 = vadd.f32 %v1126, %v1147
  %v1151 = vadd.f32 %v1127, %v1148
  %s1152 = scalar_lea.vmem %s4, 408
  %v1153 = vld [vmem:[%s1152] sm:$0x3f]
  %v1154 = vld [vmem:[%s1152 + $0x8] sm:$0x3f]
  %v1155 = vld [vmem:[%s1152 + $0x10] sm:$0x3f]
  %1156 = vrot.lane.b32.xlu0 %v969, 109
  %v1157 = vpop.permute.xlu0 %1156
  %1158 = vrot.lane.b32.xlu0 %v970, 109
  %v1159 = vpop.permute.xlu0 %1158
  %1160 = vrot.lane.b32.xlu0 %v971, 109
  %v1161 = vpop.permute.xlu0 %1160
  %1162 = vrot.lane.b32.xlu0 %v1082, 109
  %v1163 = vpop.permute.xlu0 %1162
  %v1164 = vsel %vm235, %v1157, %v1159
  %v1165 = vsel %vm235, %v1159, %v1161
  %v1166 = vsel %vm235, %v1161, %v1163
  %v1170 = vmul.f32 %v1153, %v1164
  %v1171 = vmul.f32 %v1154, %v1165
  %v1172 = vmul.f32 %v1155, %v1166
  %v1173 = vadd.f32 %v1149, %v1170
  %v1174 = vadd.f32 %v1150, %v1171
  %v1175 = vadd.f32 %v1151, %v1172
  %s1176 = scalar_lea.vmem %s4, 432
  %v1177 = vld [vmem:[%s1176] sm:$0x3f]
  %v1178 = vld [vmem:[%s1176 + $0x8] sm:$0x3f]
  %v1179 = vld [vmem:[%s1176 + $0x10] sm:$0x3f]
  %v1180 = vld [vmem:[%s746] sm:$0x3f]
  %v1181 = vld [vmem:[%s746 + $0x8] sm:$0x3f]
  %v1182 = vld [vmem:[%s746 + $0x10] sm:$0x3f]
  %v1183 = vld [vmem:[%s746 + $0x18] sm:$0x3f]
  %1188 = vrot.lane.b32.xlu0 %v1180, 19
  %v1189 = vpop.permute.xlu0 %1188
  %1190 = vrot.lane.b32.xlu0 %v1181, 19
  %v1191 = vpop.permute.xlu0 %1190
  %1192 = vrot.lane.b32.xlu0 %v1182, 19
  %v1193 = vpop.permute.xlu0 %1192
  %1194 = vrot.lane.b32.xlu0 %v1183, 19
  %v1195 = vpop.permute.xlu0 %1194
  %v1196 = vsel %vm48, %v1189, %v1191
  %v1197 = vsel %vm48, %v1191, %v1193
  %v1198 = vsel %vm48, %v1193, %v1195
  %v1202 = vmul.f32 %v1177, %v1196
  %v1203 = vmul.f32 %v1178, %v1197
  %v1204 = vmul.f32 %v1179, %v1198
  %v1205 = vadd.f32 %v1173, %v1202
  %v1206 = vadd.f32 %v1174, %v1203
  %v1207 = vadd.f32 %v1175, %v1204
  %s1208 = scalar_lea.vmem %s4, 456
  %v1209 = vld [vmem:[%s1208] sm:$0x3f]
  %v1210 = vld [vmem:[%s1208 + $0x8] sm:$0x3f]
  %v1211 = vld [vmem:[%s1208 + $0x10] sm:$0x3f]
  %1212 = vrot.lane.b32.xlu0 %v1180, 18
  %v1213 = vpop.permute.xlu0 %1212
  %1214 = vrot.lane.b32.xlu0 %v1181, 18
  %v1215 = vpop.permute.xlu0 %1214
  %1216 = vrot.lane.b32.xlu0 %v1182, 18
  %v1217 = vpop.permute.xlu0 %1216
  %1218 = vrot.lane.b32.xlu0 %v1183, 18
  %v1219 = vpop.permute.xlu0 %1218
  %v1220 = vsel %vm73, %v1213, %v1215
  %v1221 = vsel %vm73, %v1215, %v1217
  %v1222 = vsel %vm73, %v1217, %v1219
  %v1226 = vmul.f32 %v1209, %v1220
  %v1227 = vmul.f32 %v1210, %v1221
  %v1228 = vmul.f32 %v1211, %v1222
  %v1229 = vadd.f32 %v1205, %v1226
  %v1230 = vadd.f32 %v1206, %v1227
  %v1231 = vadd.f32 %v1207, %v1228
  %s1232 = scalar_lea.vmem %s4, 480
  %v1233 = vld [vmem:[%s1232] sm:$0x3f]
  %v1234 = vld [vmem:[%s1232 + $0x8] sm:$0x3f]
  %v1235 = vld [vmem:[%s1232 + $0x10] sm:$0x3f]
  %1236 = vrot.lane.b32.xlu0 %v1180, 17
  %v1237 = vpop.permute.xlu0 %1236
  %1238 = vrot.lane.b32.xlu0 %v1181, 17
  %v1239 = vpop.permute.xlu0 %1238
  %1240 = vrot.lane.b32.xlu0 %v1182, 17
  %v1241 = vpop.permute.xlu0 %1240
  %1242 = vrot.lane.b32.xlu0 %v1183, 17
  %v1243 = vpop.permute.xlu0 %1242
  %v1244 = vsel %vm98, %v1237, %v1239
  %v1245 = vsel %vm98, %v1239, %v1241
  %v1246 = vsel %vm98, %v1241, %v1243
  %v1250 = vmul.f32 %v1233, %v1244
  %v1251 = vmul.f32 %v1234, %v1245
  %v1252 = vmul.f32 %v1235, %v1246
  %v1253 = vadd.f32 %v1229, %v1250
  %v1254 = vadd.f32 %v1230, %v1251
  %v1255 = vadd.f32 %v1231, %v1252
  %s1256 = scalar_lea.vmem %s4, 504
  %v1257 = vld [vmem:[%s1256] sm:$0x3f]
  %v1258 = vld [vmem:[%s1256 + $0x8] sm:$0x3f]
  %v1259 = vld [vmem:[%s1256 + $0x10] sm:$0x3f]
  %1260 = vrot.lane.b32.xlu0 %v1180, 1
  %v1261 = vpop.permute.xlu0 %1260
  %1262 = vrot.lane.b32.xlu0 %v1181, 1
  %v1263 = vpop.permute.xlu0 %1262
  %1264 = vrot.lane.b32.xlu0 %v1182, 1
  %v1265 = vpop.permute.xlu0 %1264
  %1266 = vrot.lane.b32.xlu0 %v1183, 1
  %v1267 = vpop.permute.xlu0 %1266
  %v1268 = vsel %vm123, %v1261, %v1263
  %v1269 = vsel %vm123, %v1263, %v1265
  %v1270 = vsel %vm123, %v1265, %v1267
  %v1274 = vmul.f32 %v1257, %v1268
  %v1275 = vmul.f32 %v1258, %v1269
  %v1276 = vmul.f32 %v1259, %v1270
  %v1277 = vadd.f32 %v1253, %v1274
  %v1278 = vadd.f32 %v1254, %v1275
  %v1279 = vadd.f32 %v1255, %v1276
  %s1280 = scalar_lea.vmem %s4, 528
  %v1281 = vld [vmem:[%s1280] sm:$0x3f]
  %v1282 = vld [vmem:[%s1280 + $0x8] sm:$0x3f]
  %v1283 = vld [vmem:[%s1280 + $0x10] sm:$0x3f]
  %v1284 = vmul.f32 %v1281, %v1181
  %v1285 = vmul.f32 %v1282, %v1182
  %v1286 = vmul.f32 %v1283, %v1183
  %v1287 = vadd.f32 %v1277, %v1284
  %v1288 = vadd.f32 %v1278, %v1285
  %v1289 = vadd.f32 %v1279, %v1286
  %s1290 = scalar_lea.vmem %s4, 552
  %v1291 = vld [vmem:[%s1290] sm:$0x3f]
  %v1292 = vld [vmem:[%s1290 + $0x8] sm:$0x3f]
  %v1293 = vld [vmem:[%s1290 + $0x10] sm:$0x3f]
  %v1294 = vld [vmem:[%s746 + $0x20] sm:$0x3f]
  %1296 = vrot.lane.b32.xlu0 %v1181, 127
  %v1297 = vpop.permute.xlu0 %1296
  %1298 = vrot.lane.b32.xlu0 %v1182, 127
  %v1299 = vpop.permute.xlu0 %1298
  %1300 = vrot.lane.b32.xlu0 %v1183, 127
  %v1301 = vpop.permute.xlu0 %1300
  %1302 = vrot.lane.b32.xlu0 %v1294, 127
  %v1303 = vpop.permute.xlu0 %1302
  %v1304 = vsel %vm160, %v1297, %v1299
  %v1305 = vsel %vm160, %v1299, %v1301
  %v1306 = vsel %vm160, %v1301, %v1303
  %v1310 = vmul.f32 %v1291, %v1304
  %v1311 = vmul.f32 %v1292, %v1305
  %v1312 = vmul.f32 %v1293, %v1306
  %v1313 = vadd.f32 %v1287, %v1310
  %v1314 = vadd.f32 %v1288, %v1311
  %v1315 = vadd.f32 %v1289, %v1312
  %s1316 = scalar_lea.vmem %s4, 576
  %v1317 = vld [vmem:[%s1316] sm:$0x3f]
  %v1318 = vld [vmem:[%s1316 + $0x8] sm:$0x3f]
  %v1319 = vld [vmem:[%s1316 + $0x10] sm:$0x3f]
  %1320 = vrot.lane.b32.xlu0 %v1181, 111
  %v1321 = vpop.permute.xlu0 %1320
  %1322 = vrot.lane.b32.xlu0 %v1182, 111
  %v1323 = vpop.permute.xlu0 %1322
  %1324 = vrot.lane.b32.xlu0 %v1183, 111
  %v1325 = vpop.permute.xlu0 %1324
  %1326 = vrot.lane.b32.xlu0 %v1294, 111
  %v1327 = vpop.permute.xlu0 %1326
  %v1328 = vsel %vm185, %v1321, %v1323
  %v1329 = vsel %vm185, %v1323, %v1325
  %v1330 = vsel %vm185, %v1325, %v1327
  %v1334 = vmul.f32 %v1317, %v1328
  %v1335 = vmul.f32 %v1318, %v1329
  %v1336 = vmul.f32 %v1319, %v1330
  %v1337 = vadd.f32 %v1313, %v1334
  %v1338 = vadd.f32 %v1314, %v1335
  %v1339 = vadd.f32 %v1315, %v1336
  %s1340 = scalar_lea.vmem %s4, 600
  %v1341 = vld [vmem:[%s1340] sm:$0x3f]
  %v1342 = vld [vmem:[%s1340 + $0x8] sm:$0x3f]
  %v1343 = vld [vmem:[%s1340 + $0x10] sm:$0x3f]
  %1344 = vrot.lane.b32.xlu0 %v1181, 110
  %v1345 = vpop.permute.xlu0 %1344
  %1346 = vrot.lane.b32.xlu0 %v1182, 110
  %v1347 = vpop.permute.xlu0 %1346
  %1348 = vrot.lane.b32.xlu0 %v1183, 110
  %v1349 = vpop.permute.xlu0 %1348
  %1350 = vrot.lane.b32.xlu0 %v1294, 110
  %v1351 = vpop.permute.xlu0 %1350
  %v1352 = vsel %vm210, %v1345, %v1347
  %v1353 = vsel %vm210, %v1347, %v1349
  %v1354 = vsel %vm210, %v1349, %v1351
  %v1358 = vmul.f32 %v1341, %v1352
  %v1359 = vmul.f32 %v1342, %v1353
  %v1360 = vmul.f32 %v1343, %v1354
  %v1361 = vadd.f32 %v1337, %v1358
  %v1362 = vadd.f32 %v1338, %v1359
  %v1363 = vadd.f32 %v1339, %v1360
  %s1364 = scalar_lea.vmem %s4, 624
  %v1365 = vld [vmem:[%s1364] sm:$0x3f]
  %v1366 = vld [vmem:[%s1364 + $0x8] sm:$0x3f]
  %v1367 = vld [vmem:[%s1364 + $0x10] sm:$0x3f]
  %1368 = vrot.lane.b32.xlu0 %v1181, 109
  %v1369 = vpop.permute.xlu0 %1368
  %1370 = vrot.lane.b32.xlu0 %v1182, 109
  %v1371 = vpop.permute.xlu0 %1370
  %1372 = vrot.lane.b32.xlu0 %v1183, 109
  %v1373 = vpop.permute.xlu0 %1372
  %1374 = vrot.lane.b32.xlu0 %v1294, 109
  %v1375 = vpop.permute.xlu0 %1374
  %v1376 = vsel %vm235, %v1369, %v1371
  %v1377 = vsel %vm235, %v1371, %v1373
  %v1378 = vsel %vm235, %v1373, %v1375
  %v1382 = vmul.f32 %v1365, %v1376
  %v1383 = vmul.f32 %v1366, %v1377
  %v1384 = vmul.f32 %v1367, %v1378
  %v1385 = vadd.f32 %v1361, %v1382
  %v1386 = vadd.f32 %v1362, %v1383
  %v1387 = vadd.f32 %v1363, %v1384
  %v1388 = vmax.f32 %v1385, 0.0
  %v1389 = vmax.f32 %v1386, 0.0
  %v1390 = vmax.f32 %v1387, 0.0
  %v1391 = vld [vmem:[%s1] sm:$0x3f]
  %v1392 = vld [vmem:[%s1 + $0x8] sm:$0x3f]
  %v1393 = vld [vmem:[%s1 + $0x10] sm:$0x3f]
  %v1394 = vadd.f32 %v1388, %v1391
  %v1395 = vadd.f32 %v1389, %v1392
  %v1396 = vadd.f32 %v1390, %v1393
  %1397 = vst [vmem:[%s7] sm:$0x3f] %v1394
  %1398 = vst [vmem:[%s7 + $0x8] sm:$0x3f] %v1395
  %1399 = vst [vmem:[%s7 + $0x10] sm:$0x3f] %v1396
  // Predicated region
  $region30: #{simple_residual_block.1} parent=0 // pred_check
    _
  $region31: #{simple_residual_block.1} parent=0 // pred_check_branch
    %1401 = sbr.rel (0) target = $region33
  $region32: #{simple_residual_block.1} parent=0 // pred_region
    _
  $region33: #{simple_residual_block.1} parent=0 // pred_fallthru
    _
  // Predicated region
  $region34: #{simple_residual_block.1} parent=0 // pred_check
    _
  $region35: #{simple_residual_block.1} parent=0 // pred_check_branch
    %1403 = sbr.rel (0) target = $region37
  $region36: #{simple_residual_block.1} parent=0 // pred_region
    _
  $region37: #{simple_residual_block.1} parent=0 // pred_fallthru
    _

</llo_original>
